<compile_context>
chip_gen: v5e
topology: v5e:2x2
jax: 0.10.0
libtpu: 0.0.40
codegen_flags: <defaults>
</compile_context>

<pallas_src>
import functools
import math

import jax
import jax.numpy as jnp
from jax import lax
from jax.experimental import pallas as pl
from jax.experimental.pallas import tpu as pltpu


# ----------------------------- fused Pallas kernel ---------------------------

def _decoder_kernel(x_ref, cross_ref, t_ref,
                    wq_ref, wk_ref, wv_ref, wo_ref,
                    w1_ref, b1_ref, w2_ref, b2_ref,
                    gamma_ref, beta_ref, wp_ref, bp_ref,
                    o_ref, x_acc, *, scale, eps):
    layer = pl.program_id(1)
    n_layers = pl.num_programs(1)

    # Load the batch's x into the resident VMEM accumulator at the first layer.
    @pl.when(layer == 0)
    def _():
        x_acc[...] = x_ref[0]

    x = x_acc[...]        # (L, D) f32, resident across the layer axis
    c = cross_ref[0]      # (S, D)
    ti = t_ref[0, 0]      # (L, D)

    # ---- cross attention: x + softmax((xWq)(cWk)^T * scale) (cWv) Wo + t_i
    q = jnp.dot(x, wq_ref[0], preferred_element_type=jnp.float32)
    k = jnp.dot(c, wk_ref[0], preferred_element_type=jnp.float32)
    v = jnp.dot(c, wv_ref[0], preferred_element_type=jnp.float32)

    s = lax.dot_general(q, k, (((1,), (1,)), ((), ())),
                        preferred_element_type=jnp.float32) * scale   # (L, S)
    s = s - jnp.max(s, axis=-1, keepdims=True)
    p = jnp.exp(s)
    p = p * pl.reciprocal(jnp.sum(p, axis=-1, keepdims=True), approx=True)
    a = jnp.dot(p, v, preferred_element_type=jnp.float32)             # (L, D)
    x = x + jnp.dot(a, wo_ref[0], preferred_element_type=jnp.float32) + ti

    # ---- FFN residual: x + relu(x @ W1 + b1) @ W2 + b2
    h = jnp.dot(x, w1_ref[0], preferred_element_type=jnp.float32) + b1_ref[0]
    h = jnp.maximum(h, 0.0)
    x = x + jnp.dot(h, w2_ref[0], preferred_element_type=jnp.float32) + b2_ref[0]

    x_acc[...] = x

    # ---- epilogue on the last layer: LayerNorm + (lane-dense, padded) projection
    @pl.when(layer == n_layers - 1)
    def _():
        xe = x_acc[...]
        mu = jnp.mean(xe, axis=-1, keepdims=True)
        xc = xe - mu
        var = jnp.mean(xc * xc, axis=-1, keepdims=True)
        xn = xc * lax.rsqrt(var + eps) * gamma_ref[...] + beta_ref[...]
        o_ref[0] = (jnp.dot(xn, wp_ref[...], preferred_element_type=jnp.float32)
                    + bp_ref[...])


# ----------------------------- wrapper ---------------------------------------

def decoder_forward(x, cross, t, stacked, norm_params, proj_params,
                    x_mask=None, cross_mask=None, eps=1e-5):
    """Mirror of Decoder.forward: layers -> norm -> projection, fully fused."""
    # TODO(synk): attention masks are not supported by the fused kernel.
    assert x_mask is None and cross_mask is None, "masks are not supported"

    B, L, D = x.shape
    S = cross.shape[1]
    NL = t.shape[0]
    F = stacked["w1"].shape[-1]
    c_out = proj_params["w"].shape[1]
    c_pad = ((c_out + 127) // 128) * 128          # lane-dense output last dim

    # Zero-pad the projection so the kernel writes a 128-multiple-wide slab.
    wp = jnp.pad(proj_params["w"], ((0, 0), (0, c_pad - c_out)))
    bp = jnp.pad(proj_params["b"], ((0, 0), (0, c_pad - c_out)))

    def bcast(shape):
        return pl.BlockSpec(shape, lambda b, l: (0,) * len(shape))

    def per_layer(shape):
        blk = (1,) + tuple(shape[1:])
        return pl.BlockSpec(blk, lambda b, l: (l,) + (0,) * (len(shape) - 1))

    kernel = functools.partial(_decoder_kernel, scale=1.0 / math.sqrt(D), eps=eps)

    out = pl.pallas_call(
        kernel,
        out_shape=jax.ShapeDtypeStruct((B, L, c_pad), jnp.float32),
        grid=(B, NL),
        in_specs=[
            pl.BlockSpec((1, L, D), lambda b, l: (b, 0, 0)),        # x
            pl.BlockSpec((1, S, D), lambda b, l: (b, 0, 0)),        # cross
            pl.BlockSpec((1, 1, L, D), lambda b, l: (l, b, 0, 0)),  # t
            per_layer((NL, D, D)),   # wq
            per_layer((NL, D, D)),   # wk
            per_layer((NL, D, D)),   # wv
            per_layer((NL, D, D)),   # wo
            per_layer((NL, D, F)),   # w1
            per_layer((NL, 1, F)),   # b1
            per_layer((NL, F, D)),   # w2
            per_layer((NL, 1, D)),   # b2
            bcast((1, D)),           # gamma
            bcast((1, D)),           # beta
            bcast((D, c_pad)),       # proj W (zero-padded lane-dense)
            bcast((1, c_pad)),       # proj b
        ],
        out_specs=pl.BlockSpec((1, L, c_pad), lambda b, l: (b, 0, 0)),
        scratch_shapes=[pltpu.VMEM((L, D), jnp.float32)],
        compiler_params=pltpu.CompilerParams(
            dimension_semantics=("parallel", "arbitrary")),
    )(x, cross, t,
      stacked["wq"], stacked["wk"], stacked["wv"], stacked["wo"],
      stacked["w1"], stacked["b1"], stacked["w2"], stacked["b2"],
      norm_params["gamma"], norm_params["beta"], wp, bp)

    return out[:, :, :c_out]


# ----------------------------- params + pure-JAX reference -------------------

def init_params(key, num_layers, d_model, d_ff, c_out):
    ks = jax.random.split(key, 7)
    stacked = dict(
        wq=jax.random.normal(ks[0], (num_layers, d_model, d_model), jnp.float32) * 0.1,
        wk=jax.random.normal(ks[1], (num_layers, d_model, d_model), jnp.float32) * 0.1,
        wv=jax.random.normal(ks[2], (num_layers, d_model, d_model), jnp.float32) * 0.1,
        wo=jax.random.normal(ks[3], (num_layers, d_model, d_model), jnp.float32) * 0.1,
        w1=jax.random.normal(ks[4], (num_layers, d_model, d_ff), jnp.float32) * 0.1,
        b1=jnp.zeros((num_layers, 1, d_ff), jnp.float32),
        w2=jax.random.normal(ks[5], (num_layers, d_ff, d_model), jnp.float32) * 0.1,
        b2=jnp.zeros((num_layers, 1, d_model), jnp.float32),
    )
    norm_params = dict(gamma=jnp.ones((1, d_model), jnp.float32),
                       beta=jnp.zeros((1, d_model), jnp.float32))
    proj_params = dict(w=jax.random.normal(ks[6], (d_model, c_out), jnp.float32) * 0.1,
                       b=jnp.zeros((1, c_out), jnp.float32))
    return stacked, norm_params, proj_params


def decoder_reference(x, cross, t, stacked, norm_params, proj_params, eps=1e-5):
    scale = 1.0 / math.sqrt(x.shape[-1])
    for i in range(t.shape[0]):
        q = x @ stacked["wq"][i]
        k = cross @ stacked["wk"][i]
        v = cross @ stacked["wv"][i]
        s = jnp.einsum("bld,bsd->bls", q, k) * scale
        p = jax.nn.softmax(s, axis=-1)
        a = jnp.einsum("bls,bsd->bld", p, v)
        x = x + a @ stacked["wo"][i] + t[i]
        h = jax.nn.relu(x @ stacked["w1"][i] + stacked["b1"][i])
        x = x + h @ stacked["w2"][i] + stacked["b2"][i]
    mu = jnp.mean(x, axis=-1, keepdims=True)
    var = jnp.mean((x - mu) ** 2, axis=-1, keepdims=True)
    x = (x - mu) / jnp.sqrt(var + eps) * norm_params["gamma"] + norm_params["beta"]
    return x @ proj_params["w"] + proj_params["b"]


# ----------------------------- main -------------------------------------------

if __name__ == "__main__":
    B, L, S, D, DFF, C_OUT, NUM_LAYERS = 2, 8, 8, 32, 64, 4, 2

    key = jax.random.PRNGKey(0)
    k_x, k_cross, k_t, k_p = jax.random.split(key, 4)

    x = jax.random.normal(k_x, (B, L, D), jnp.float32)
    cross = jax.random.normal(k_cross, (B, S, D), jnp.float32)
    t = jax.random.normal(k_t, (NUM_LAYERS, B, L, D), jnp.float32)

    stacked, norm_params, proj_params = init_params(k_p, NUM_LAYERS, D, DFF, C_OUT)

    out = decoder_forward(x, cross, t, stacked, norm_params, proj_params)
    out = jax.block_until_ready(out)

    assert out.shape == (B, L, C_OUT), out.shape
    assert bool(jnp.all(jnp.isfinite(out)))

    ref = decoder_reference(x, cross, t, stacked, norm_params, proj_params)
    max_err = float(jnp.max(jnp.abs(out - ref)))
    assert jnp.allclose(out, ref, rtol=5e-2, atol=5e-2), max_err

    print("KERNEL_OK")
</pallas_src>

<mosaic_0001>
module attributes {stable_mosaic.version = 11 : i64} {
  func.func @_decoder_kernel(%arg0: i32, %arg1: i32, %arg2: memref<1x8x32xf32, #tpu.memory_space<vmem>>, %arg3: memref<1x8x32xf32, #tpu.memory_space<vmem>>, %arg4: memref<1x1x8x32xf32, #tpu.memory_space<vmem>>, %arg5: memref<1x32x32xf32, #tpu.memory_space<vmem>>, %arg6: memref<1x32x32xf32, #tpu.memory_space<vmem>>, %arg7: memref<1x32x32xf32, #tpu.memory_space<vmem>>, %arg8: memref<1x32x32xf32, #tpu.memory_space<vmem>>, %arg9: memref<1x32x64xf32, #tpu.memory_space<vmem>>, %arg10: memref<1x1x64xf32, #tpu.memory_space<vmem>>, %arg11: memref<1x64x32xf32, #tpu.memory_space<vmem>>, %arg12: memref<1x1x32xf32, #tpu.memory_space<vmem>>, %arg13: memref<1x32xf32, #tpu.memory_space<vmem>>, %arg14: memref<1x32xf32, #tpu.memory_space<vmem>>, %arg15: memref<32x128xf32, #tpu.memory_space<vmem>>, %arg16: memref<1x128xf32, #tpu.memory_space<vmem>>, %arg17: memref<1x8x128xf32, #tpu.memory_space<vmem>>, %arg18: memref<8x32xf32, #tpu.memory_space<vmem>>) attributes {dimension_semantics = [#tpu.dimension_semantics<parallel>, #tpu.dimension_semantics<arbitrary>], iteration_bounds = array<i64: 2, 2>, scalar_prefetch = 0 : i64, scratch_operands = 1 : i64, tpu.core_type = #tpu.core_type<tc>, window_params = [{transform_indices = @transform_0, window_bounds = array<i64: 1, 8, 32>}, {transform_indices = @transform_1, window_bounds = array<i64: 1, 8, 32>}, {transform_indices = @transform_2, window_bounds = array<i64: 1, 1, 8, 32>}, {transform_indices = @transform_3, window_bounds = array<i64: 1, 32, 32>}, {transform_indices = @transform_4, window_bounds = array<i64: 1, 32, 32>}, {transform_indices = @transform_5, window_bounds = array<i64: 1, 32, 32>}, {transform_indices = @transform_6, window_bounds = array<i64: 1, 32, 32>}, {transform_indices = @transform_7, window_bounds = array<i64: 1, 32, 64>}, {transform_indices = @transform_8, window_bounds = array<i64: 1, 1, 64>}, {transform_indices = @transform_9, window_bounds = array<i64: 1, 64, 32>}, {transform_indices = @transform_10, window_bounds = array<i64: 1, 1, 32>}, {pipeline_mode = #tpu.pipeline_mode<synchronous>, transform_indices = @transform_11, window_bounds = array<i64: 1, 32>}, {pipeline_mode = #tpu.pipeline_mode<synchronous>, transform_indices = @transform_12, window_bounds = array<i64: 1, 32>}, {pipeline_mode = #tpu.pipeline_mode<synchronous>, transform_indices = @transform_13, window_bounds = array<i64: 32, 128>}, {pipeline_mode = #tpu.pipeline_mode<synchronous>, transform_indices = @transform_14, window_bounds = array<i64: 1, 128>}, {transform_indices = @transform_15, window_bounds = array<i64: 1, 8, 128>}]} {
    %c0_i32 = arith.constant 0 : i32
    %0 = arith.cmpi eq, %arg1, %c0_i32 : i32
    %1 = arith.extui %0 : i1 to i32
    %c0_i32_0 = arith.constant 0 : i32
    %2 = arith.cmpi ne, %1, %c0_i32_0 : i32
    scf.if %2 {
      %c0_47 = arith.constant 0 : index
      %c0_48 = arith.constant 0 : index
      %c0_49 = arith.constant 0 : index
      %57 = vector.load %arg2[%c0_47, %c0_48, %c0_49] : memref<1x8x32xf32, #tpu.memory_space<vmem>>, vector<1x8x32xf32>
      %58 = vector.shape_cast %57 : vector<1x8x32xf32> to vector<8x32xf32>
      %c0_50 = arith.constant 0 : index
      %c0_51 = arith.constant 0 : index
      %59 = vector.load %arg18[%c0_50, %c0_51] : memref<8x32xf32, #tpu.memory_space<vmem>>, vector<8x32xf32>
      tpu.vector_store %arg18[%c0_50, %c0_51], %58 {strides = array<i32>} : memref<8x32xf32, #tpu.memory_space<vmem>>, vector<8x32xf32>,
    } else {
    }
    %c0 = arith.constant 0 : index
    %c0_1 = arith.constant 0 : index
    %3 = vector.load %arg18[%c0, %c0_1] : memref<8x32xf32, #tpu.memory_space<vmem>>, vector<8x32xf32>
    %c0_2 = arith.constant 0 : index
    %c0_3 = arith.constant 0 : index
    %c0_4 = arith.constant 0 : index
    %4 = vector.load %arg3[%c0_2, %c0_3, %c0_4] : memref<1x8x32xf32, #tpu.memory_space<vmem>>, vector<1x8x32xf32>
    %5 = vector.shape_cast %4 : vector<1x8x32xf32> to vector<8x32xf32>
    %c0_5 = arith.constant 0 : index
    %c0_6 = arith.constant 0 : index
    %c0_7 = arith.constant 0 : index
    %c0_8 = arith.constant 0 : index
    %6 = vector.load %arg4[%c0_5, %c0_6, %c0_7, %c0_8] : memref<1x1x8x32xf32, #tpu.memory_space<vmem>>, vector<1x1x8x32xf32>
    %7 = vector.shape_cast %6 : vector<1x1x8x32xf32> to vector<8x32xf32>
    %c0_9 = arith.constant 0 : index
    %c0_10 = arith.constant 0 : index
    %c0_11 = arith.constant 0 : index
    %8 = vector.load %arg5[%c0_9, %c0_10, %c0_11] : memref<1x32x32xf32, #tpu.memory_space<vmem>>, vector<1x32x32xf32>
    %9 = vector.shape_cast %8 : vector<1x32x32xf32> to vector<32x32xf32>
    %cst = arith.constant dense<0.000000e+00> : vector<8x32xf32>
    %10 = tpu.matmul %3, %9, %cst {dimension_numbers = #tpu.dot_dimension_numbers<[1], [0], [0], [1], [0, 0, 1, 1], [], []>} : vector<8x32xf32>, vector<32x32xf32>, vector<8x32xf32> -> vector<8x32xf32>
    %c0_12 = arith.constant 0 : index
    %c0_13 = arith.constant 0 : index
    %c0_14 = arith.constant 0 : index
    %11 = vector.load %arg6[%c0_12, %c0_13, %c0_14] : memref<1x32x32xf32, #tpu.memory_space<vmem>>, vector<1x32x32xf32>
    %12 = vector.shape_cast %11 : vector<1x32x32xf32> to vector<32x32xf32>
    %cst_15 = arith.constant dense<0.000000e+00> : vector<8x32xf32>
    %13 = tpu.matmul %5, %12, %cst_15 {dimension_numbers = #tpu.dot_dimension_numbers<[1], [0], [0], [1], [0, 0, 1, 1], [], []>} : vector<8x32xf32>, vector<32x32xf32>, vector<8x32xf32> -> vector<8x32xf32>
    %c0_16 = arith.constant 0 : index
    %c0_17 = arith.constant 0 : index
    %c0_18 = arith.constant 0 : index
    %14 = vector.load %arg7[%c0_16, %c0_17, %c0_18] : memref<1x32x32xf32, #tpu.memory_space<vmem>>, vector<1x32x32xf32>
    %15 = vector.shape_cast %14 : vector<1x32x32xf32> to vector<32x32xf32>
    %cst_19 = arith.constant dense<0.000000e+00> : vector<8x32xf32>
    %16 = tpu.matmul %5, %15, %cst_19 {dimension_numbers = #tpu.dot_dimension_numbers<[1], [0], [0], [1], [0, 0, 1, 1], [], []>} : vector<8x32xf32>, vector<32x32xf32>, vector<8x32xf32> -> vector<8x32xf32>
    %cst_20 = arith.constant dense<0.000000e+00> : vector<8x8xf32>
    %17 = tpu.matmul %10, %13, %cst_20 {dimension_numbers = #tpu.dot_dimension_numbers<[1], [1], [0], [0], [0, 0, 1, 0], [], []>} : vector<8x32xf32>, vector<8x32xf32>, vector<8x8xf32> -> vector<8x8xf32>
    %cst_21 = arith.constant 0.176776692 : f32
    %18 = vector.broadcast %cst_21 : f32 to vector<8x8xf32>
    %19 = arith.mulf %17, %18 : vector<8x8xf32>
    %cst_22 = arith.constant dense<0xFF800000> : vector<8xf32>
    %20 = vector.multi_reduction <maximumf>, %19, %cst_22 [1] : vector<8x8xf32> to vector<8xf32>
    %21 = vector.shape_cast %20 : vector<8xf32> to vector<8x1xf32>
    %22 = vector.broadcast %21 : vector<8x1xf32> to vector<8x8xf32>
    %23 = arith.subf %19, %22 : vector<8x8xf32>
    %24 = math.exp %23 : vector<8x8xf32>
    %cst_23 = arith.constant dense<0.000000e+00> : vector<8xf32>
    %25 = vector.multi_reduction <add>, %24, %cst_23 [1] : vector<8x8xf32> to vector<8xf32>
    %26 = vector.shape_cast %25 : vector<8xf32> to vector<8x1xf32>
    %27 = tpu.reciprocal %26 {approx = true} : vector<8x1xf32> -> vector<8x1xf32>
    %28 = vector.broadcast %27 : vector<8x1xf32> to vector<8x8xf32>
    %29 = arith.mulf %24, %28 : vector<8x8xf32>
    %cst_24 = arith.constant dense<0.000000e+00> : vector<8x32xf32>
    %30 = tpu.matmul %29, %16, %cst_24 {dimension_numbers = #tpu.dot_dimension_numbers<[1], [0], [0], [1], [0, 0, 1, 1], [], []>} : vector<8x8xf32>, vector<8x32xf32>, vector<8x32xf32> -> vector<8x32xf32>
    %c0_25 = arith.constant 0 : index
    %c0_26 = arith.constant 0 : index
    %c0_27 = arith.constant 0 : index
    %31 = vector.load %arg8[%c0_25, %c0_26, %c0_27] : memref<1x32x32xf32, #tpu.memory_space<vmem>>, vector<1x32x32xf32>
    %32 = vector.shape_cast %31 : vector<1x32x32xf32> to vector<32x32xf32>
    %cst_28 = arith.constant dense<0.000000e+00> : vector<8x32xf32>
    %33 = tpu.matmul %30, %32, %cst_28 {dimension_numbers = #tpu.dot_dimension_numbers<[1], [0], [0], [1], [0, 0, 1, 1], [], []>} : vector<8x32xf32>, vector<32x32xf32>, vector<8x32xf32> -> vector<8x32xf32>
    %34 = arith.addf %3, %33 : vector<8x32xf32>
    %35 = arith.addf %34, %7 : vector<8x32xf32>
    %c0_29 = arith.constant 0 : index
    %c0_30 = arith.constant 0 : index
    %c0_31 = arith.constant 0 : index
    %36 = vector.load %arg9[%c0_29, %c0_30, %c0_31] : memref<1x32x64xf32, #tpu.memory_space<vmem>>, vector<1x32x64xf32>
    %37 = vector.shape_cast %36 : vector<1x32x64xf32> to vector<32x64xf32>
    %cst_32 = arith.constant dense<0.000000e+00> : vector<8x64xf32>
    %38 = tpu.matmul %35, %37, %cst_32 {dimension_numbers = #tpu.dot_dimension_numbers<[1], [0], [0], [1], [0, 0, 1, 1], [], []>} : vector<8x32xf32>, vector<32x64xf32>, vector<8x64xf32> -> vector<8x64xf32>
    %c0_33 = arith.constant 0 : index
    %c0_34 = arith.constant 0 : index
    %c0_35 = arith.constant 0 : index
    %39 = vector.load %arg10[%c0_33, %c0_34, %c0_35] : memref<1x1x64xf32, #tpu.memory_space<vmem>>, vector<1x1x64xf32>
    %40 = vector.shape_cast %39 : vector<1x1x64xf32> to vector<1x64xf32>
    %41 = vector.broadcast %40 : vector<1x64xf32> to vector<8x64xf32>
    %42 = arith.addf %38, %41 : vector<8x64xf32>
    %cst_36 = arith.constant 0.000000e+00 : f32
    %43 = vector.broadcast %cst_36 : f32 to vector<8x64xf32>
    %44 = arith.maximumf %42, %43 : vector<8x64xf32>
    %c0_37 = arith.constant 0 : index
    %c0_38 = arith.constant 0 : index
    %c0_39 = arith.constant 0 : index
    %45 = vector.load %arg11[%c0_37, %c0_38, %c0_39] : memref<1x64x32xf32, #tpu.memory_space<vmem>>, vector<1x64x32xf32>
    %46 = vector.shape_cast %45 : vector<1x64x32xf32> to vector<64x32xf32>
    %cst_40 = arith.constant dense<0.000000e+00> : vector<8x32xf32>
    %47 = tpu.matmul %44, %46, %cst_40 {dimension_numbers = #tpu.dot_dimension_numbers<[1], [0], [0], [1], [0, 0, 1, 1], [], []>} : vector<8x64xf32>, vector<64x32xf32>, vector<8x32xf32> -> vector<8x32xf32>
    %48 = arith.addf %35, %47 : vector<8x32xf32>
    %c0_41 = arith.constant 0 : index
    %c0_42 = arith.constant 0 : index
    %c0_43 = arith.constant 0 : index
    %49 = vector.load %arg12[%c0_41, %c0_42, %c0_43] : memref<1x1x32xf32, #tpu.memory_space<vmem>>, vector<1x1x32xf32>
    %50 = vector.shape_cast %49 : vector<1x1x32xf32> to vector<1x32xf32>
    %51 = vector.broadcast %50 : vector<1x32xf32> to vector<8x32xf32>
    %52 = arith.addf %48, %51 : vector<8x32xf32>
    %c0_44 = arith.constant 0 : index
    %c0_45 = arith.constant 0 : index
    %53 = vector.load %arg18[%c0_44, %c0_45] : memref<8x32xf32, #tpu.memory_space<vmem>>, vector<8x32xf32>
    tpu.vector_store %arg18[%c0_44, %c0_45], %52 {strides = array<i32>} : memref<8x32xf32, #tpu.memory_space<vmem>>, vector<8x32xf32>,
    %c1_i32 = arith.constant 1 : i32
    %54 = arith.cmpi eq, %arg1, %c1_i32 : i32
    %55 = arith.extui %54 : i1 to i32
    %c0_i32_46 = arith.constant 0 : i32
    %56 = arith.cmpi ne, %55, %c0_i32_46 : i32
    scf.if %56 {
      %c0_47 = arith.constant 0 : index
      %c0_48 = arith.constant 0 : index
      %57 = vector.load %arg18[%c0_47, %c0_48] : memref<8x32xf32, #tpu.memory_space<vmem>>, vector<8x32xf32>
      %cst_49 = arith.constant dense<0.000000e+00> : vector<8xf32>
      %58 = vector.multi_reduction <add>, %57, %cst_49 [1] : vector<8x32xf32> to vector<8xf32>
      %59 = vector.shape_cast %58 : vector<8xf32> to vector<8x1xf32>
      %cst_50 = arith.constant 3.200000e+01 : f32
      %60 = vector.broadcast %cst_50 : f32 to vector<8x1xf32>
      %61 = arith.divf %59, %60 : vector<8x1xf32>
      %62 = vector.broadcast %61 : vector<8x1xf32> to vector<8x32xf32>
      %63 = arith.subf %57, %62 : vector<8x32xf32>
      %64 = arith.mulf %63, %63 : vector<8x32xf32>
      %cst_51 = arith.constant dense<0.000000e+00> : vector<8xf32>
      %65 = vector.multi_reduction <add>, %64, %cst_51 [1] : vector<8x32xf32> to vector<8xf32>
      %66 = vector.shape_cast %65 : vector<8xf32> to vector<8x1xf32>
      %cst_52 = arith.constant 3.200000e+01 : f32
      %67 = vector.broadcast %cst_52 : f32 to vector<8x1xf32>
      %68 = arith.divf %66, %67 : vector<8x1xf32>
      %cst_53 = arith.constant 9.99999974E-6 : f32
      %69 = vector.broadcast %cst_53 : f32 to vector<8x1xf32>
      %70 = arith.addf %68, %69 : vector<8x1xf32>
      %71 = math.rsqrt %70 : vector<8x1xf32>
      %72 = vector.broadcast %71 : vector<8x1xf32> to vector<8x32xf32>
      %73 = arith.mulf %63, %72 : vector<8x32xf32>
      %c0_54 = arith.constant 0 : index
      %c0_55 = arith.constant 0 : index
      %74 = vector.load %arg13[%c0_54, %c0_55] : memref<1x32xf32, #tpu.memory_space<vmem>>, vector<1x32xf32>
      %75 = vector.broadcast %74 : vector<1x32xf32> to vector<8x32xf32>
      %76 = arith.mulf %73, %75 : vector<8x32xf32>
      %c0_56 = arith.constant 0 : index
      %c0_57 = arith.constant 0 : index
      %77 = vector.load %arg14[%c0_56, %c0_57] : memref<1x32xf32, #tpu.memory_space<vmem>>, vector<1x32xf32>
      %78 = vector.broadcast %77 : vector<1x32xf32> to vector<8x32xf32>
      %79 = arith.addf %76, %78 : vector<8x32xf32>
      %c0_58 = arith.constant 0 : index
      %c0_59 = arith.constant 0 : index
      %80 = vector.load %arg15[%c0_58, %c0_59] : memref<32x128xf32, #tpu.memory_space<vmem>>, vector<32x128xf32>
      %cst_60 = arith.constant dense<0.000000e+00> : vector<8x128xf32>
      %81 = tpu.matmul %79, %80, %cst_60 {dimension_numbers = #tpu.dot_dimension_numbers<[1], [0], [0], [1], [0, 0, 1, 1], [], []>} : vector<8x32xf32>, vector<32x128xf32>, vector<8x128xf32> -> vector<8x128xf32>
      %c0_61 = arith.constant 0 : index
      %c0_62 = arith.constant 0 : index
      %82 = vector.load %arg16[%c0_61, %c0_62] : memref<1x128xf32, #tpu.memory_space<vmem>>, vector<1x128xf32>
      %83 = vector.broadcast %82 : vector<1x128xf32> to vector<8x128xf32>
      %84 = arith.addf %81, %83 : vector<8x128xf32>
      %c0_63 = arith.constant 0 : index
      %c0_64 = arith.constant 0 : index
      %c0_65 = arith.constant 0 : index
      %85 = vector.load %arg17[%c0_63, %c0_64, %c0_65] : memref<1x8x128xf32, #tpu.memory_space<vmem>>, vector<1x8x128xf32>
      %86 = vector.shape_cast %85 : vector<1x8x128xf32> to vector<8x128xf32>
      %87 = vector.shape_cast %84 : vector<8x128xf32> to vector<1x8x128xf32>
      tpu.vector_store %arg17[%c0_63, %c0_64, %c0_65], %87 {strides = array<i32>} : memref<1x8x128xf32, #tpu.memory_space<vmem>>, vector<1x8x128xf32>,
    } else {
    }
    return
  }
  func.func @transform_0(%arg0: i32, %arg1: i32) -> (i32, i32, i32) {
    %c0_i32 = arith.constant 0 : i32
    %c0_i32_0 = arith.constant 0 : i32
    %c0_i32_1 = arith.constant 0 : i32
    return %arg0, %c0_i32, %c0_i32_0 : i32, i32, i32
  }
  func.func @transform_1(%arg0: i32, %arg1: i32) -> (i32, i32, i32) {
    %c0_i32 = arith.constant 0 : i32
    %c0_i32_0 = arith.constant 0 : i32
    %c0_i32_1 = arith.constant 0 : i32
    return %arg0, %c0_i32, %c0_i32_0 : i32, i32, i32
  }
  func.func @transform_2(%arg0: i32, %arg1: i32) -> (i32, i32, i32, i32) {
    %c0_i32 = arith.constant 0 : i32
    %c0_i32_0 = arith.constant 0 : i32
    %c0_i32_1 = arith.constant 0 : i32
    return %arg1, %arg0, %c0_i32, %c0_i32_0 : i32, i32, i32, i32
  }
  func.func @transform_3(%arg0: i32, %arg1: i32) -> (i32, i32, i32) {
    %c0_i32 = arith.constant 0 : i32
    %c0_i32_0 = arith.constant 0 : i32
    %c0_i32_1 = arith.constant 0 : i32
    return %arg1, %c0_i32, %c0_i32_0 : i32, i32, i32
  }
  func.func @transform_4(%arg0: i32, %arg1: i32) -> (i32, i32, i32) {
    %c0_i32 = arith.constant 0 : i32
    %c0_i32_0 = arith.constant 0 : i32
    %c0_i32_1 = arith.constant 0 : i32
    return %arg1, %c0_i32, %c0_i32_0 : i32, i32, i32
  }
  func.func @transform_5(%arg0: i32, %arg1: i32) -> (i32, i32, i32) {
    %c0_i32 = arith.constant 0 : i32
    %c0_i32_0 = arith.constant 0 : i32
    %c0_i32_1 = arith.constant 0 : i32
    return %arg1, %c0_i32, %c0_i32_0 : i32, i32, i32
  }
  func.func @transform_6(%arg0: i32, %arg1: i32) -> (i32, i32, i32) {
    %c0_i32 = arith.constant 0 : i32
    %c0_i32_0 = arith.constant 0 : i32
    %c0_i32_1 = arith.constant 0 : i32
    return %arg1, %c0_i32, %c0_i32_0 : i32, i32, i32
  }
  func.func @transform_7(%arg0: i32, %arg1: i32) -> (i32, i32, i32) {
    %c0_i32 = arith.constant 0 : i32
    %c0_i32_0 = arith.constant 0 : i32
    %c0_i32_1 = arith.constant 0 : i32
    return %arg1, %c0_i32, %c0_i32_0 : i32, i32, i32
  }
  func.func @transform_8(%arg0: i32, %arg1: i32) -> (i32, i32, i32) {
    %c0_i32 = arith.constant 0 : i32
    %c0_i32_0 = arith.constant 0 : i32
    %c0_i32_1 = arith.constant 0 : i32
    return %arg1, %c0_i32, %c0_i32_0 : i32, i32, i32
  }
  func.func @transform_9(%arg0: i32, %arg1: i32) -> (i32, i32, i32) {
    %c0_i32 = arith.constant 0 : i32
    %c0_i32_0 = arith.constant 0 : i32
    %c0_i32_1 = arith.constant 0 : i32
    return %arg1, %c0_i32, %c0_i32_0 : i32, i32, i32
  }
  func.func @transform_10(%arg0: i32, %arg1: i32) -> (i32, i32, i32) {
    %c0_i32 = arith.constant 0 : i32
    %c0_i32_0 = arith.constant 0 : i32
    %c0_i32_1 = arith.constant 0 : i32
    return %arg1, %c0_i32, %c0_i32_0 : i32, i32, i32
  }
  func.func @transform_11(%arg0: i32, %arg1: i32) -> (i32, i32) {
    %c0_i32 = arith.constant 0 : i32
    %c0_i32_0 = arith.constant 0 : i32
    %c0_i32_1 = arith.constant 0 : i32
    return %c0_i32, %c0_i32_0 : i32, i32
  }
  func.func @transform_12(%arg0: i32, %arg1: i32) -> (i32, i32) {
    %c0_i32 = arith.constant 0 : i32
    %c0_i32_0 = arith.constant 0 : i32
    %c0_i32_1 = arith.constant 0 : i32
    return %c0_i32, %c0_i32_0 : i32, i32
  }
  func.func @transform_13(%arg0: i32, %arg1: i32) -> (i32, i32) {
    %c0_i32 = arith.constant 0 : i32
    %c0_i32_0 = arith.constant 0 : i32
    %c0_i32_1 = arith.constant 0 : i32
    return %c0_i32, %c0_i32_0 : i32, i32
  }
  func.func @transform_14(%arg0: i32, %arg1: i32) -> (i32, i32) {
    %c0_i32 = arith.constant 0 : i32
    %c0_i32_0 = arith.constant 0 : i32
    %c0_i32_1 = arith.constant 0 : i32
    return %c0_i32, %c0_i32_0 : i32, i32
  }
  func.func @transform_15(%arg0: i32, %arg1: i32) -> (i32, i32, i32) {
    %c0_i32 = arith.constant 0 : i32
    %c0_i32_0 = arith.constant 0 : i32
    %c0_i32_1 = arith.constant 0 : i32
    return %arg0, %c0_i32, %c0_i32_0 : i32, i32, i32
  }
}

</mosaic_0001>

<llo_original>
// kernel: tpu_custom_call.1
$region0: #{tpu_custom_call.1}
  #allocation0 [shape = 'u32[]', space=smem, size = 0x4, offset = 0x4, fixed_abs, tag = 'smem constant byte address 0x4 - core index']
  #allocation1 [shape = 'u32[72,128]{1,0:T(1,128)}', space=vmem, size = 0x9000, scoped, tag = 'internal scratch']
  #allocation2 [shape = 'f32[8,32]{1,0:T(8,128)}', space=vmem, size = 0x1000, scoped, tag = 'scratch operand']
  %s0 = inlined_call_operand.hbm [shape: f32[2,8,32], index: 0, kind: input, shape index: {}]
  %s1 = inlined_call_operand.hbm [shape: f32[2,8,32], index: 1, kind: input, shape index: {}]
  %s2 = inlined_call_operand.hbm [shape: f32[2,2,8,32], index: 2, kind: input, shape index: {}]
  %s3 = inlined_call_operand.vmem [shape: f32[2,32,32], index: 3, kind: input, shape index: {}]
  %s4 = inlined_call_operand.vmem [shape: f32[2,32,32], index: 4, kind: input, shape index: {}]
  %s5 = inlined_call_operand.vmem [shape: f32[2,32,32], index: 5, kind: input, shape index: {}]
  %s6 = inlined_call_operand.hbm [shape: f32[2,32,32], index: 6, kind: input, shape index: {}]
  %s7 = inlined_call_operand.hbm [shape: f32[2,32,64], index: 7, kind: input, shape index: {}]
  %s8 = inlined_call_operand.vmem [shape: f32[2,1,64], index: 8, kind: input, shape index: {}]
  %s9 = inlined_call_operand.vmem [shape: f32[2,64,32], index: 9, kind: input, shape index: {}]
  %s10 = inlined_call_operand.vmem [shape: f32[2,1,32], index: 10, kind: input, shape index: {}]
  %s11 = inlined_call_operand.vmem [shape: f32[1,32], index: 11, kind: input, shape index: {}]
  %s12 = inlined_call_operand.vmem [shape: f32[1,32], index: 12, kind: input, shape index: {}]
  %s13 = inlined_call_operand.hbm [shape: f32[32,128], index: 13, kind: input, shape index: {}]
  %s14 = inlined_call_operand.vmem [shape: f32[1,128], index: 14, kind: input, shape index: {}]
  %s15 = inlined_call_operand.hbm [shape: f32[2,8,128], index: 15, kind: output, shape index: {}]
  %s16 = sld [smem:[#allocation0]]
  $region125: #{tpu_custom_call.1} parent=0
    _
  %s18 = ssub.s32 1, %s16
  %s19 = scalar_select 0, %s18, %s16
  $region1: #{tpu_custom_call.1} parent=0
    #allocation3 [shape = 'u8[8192]{0}', space=vmem, size = 0x2000, scoped, tag = 'input window, operand 0']
    #allocation4 [shape = 's32[2]{0}', space=sflag, size = 0x8, scoped, tag = 'scoped memory for tpu_custom_call.1']
    #allocation5 [shape = 's32[2]{0}', space=sflag, size = 0x8, scoped, tag = 'scoped memory for tpu_custom_call.1']
    #allocation6 [shape = 'u8[8192]{0}', space=vmem, size = 0x2000, scoped, tag = 'input window, operand 1']
    #allocation7 [shape = 's32[2]{0}', space=sflag, size = 0x8, scoped, tag = 'scoped memory for tpu_custom_call.1']
    #allocation8 [shape = 'u8[8192]{0}', space=vmem, size = 0x2000, scoped, tag = 'input window, operand 2']
    #allocation9 [shape = 'u8[32768]{0}', space=vmem, size = 0x8000, scoped, tag = 'input window, operand 6']
    #allocation10 [shape = 's32[2]{0}', space=sflag, size = 0x8, scoped, tag = 'scoped memory for tpu_custom_call.1']
    #allocation11 [shape = 'u8[32768]{0}', space=vmem, size = 0x8000, scoped, tag = 'input window, operand 7']
    #allocation12 [shape = 'u8[16384]{0}', space=vmem, size = 0x4000, scoped, tag = 'input window, operand 13, single buffered']
    #allocation13 [shape = 's32[1]{0}', space=sflag, size = 0x4, scoped, tag = 'scoped memory for tpu_custom_call.1']
    #allocation14 [shape = 'u8[8192]{0}', space=vmem, size = 0x2000, scoped, tag = 'output window, operand 0']
    %20 = vsyncpa [#allocation4], 0
    %s21 = scalar_lea.sflag [#allocation4], 1
    %22 = vsyncpa %s21, 0
    %23 = vsyncpa [#allocation7], 0
    %s24 = scalar_lea.sflag [#allocation7], 1
    %25 = vsyncpa %s24, 0
    %26 = vsyncpa [#allocation10], 0
    %s27 = scalar_lea.sflag [#allocation10], 1
    %28 = vsyncpa %s27, 0
    %29 = vsyncpa [#allocation13], 0
    %30 = vsyncpa [#allocation5], 0
    %s31 = scalar_lea.sflag [#allocation5], 1
    %32 = vsyncpa %s31, 0
    loop: start=0, step=1, limit=6
    $region2: #{tpu_custom_call.1} parent=1 // loop_pre_header
      _
    $region3: #{tpu_custom_call.1} parent=1 // loop_header
      %s34 = sphi 0, %s38
      %p35 = scmp.ge.s32.totalorder %s34, 6
      %s41 = sphi 0, %s53
      %s42 = sphi 0, %s49
      %s43 = sphi 0, %s41
      %s44 = sphi 0, %s42
      %s45 = sphi 0, %s43
      %s46 = sphi 0, %s44
      %s56 = sphi 0, %s58
      %s59 = sphi 0, %s56
      %s60 = sphi 0, %s59
      %s76 = sphi 0, %s60
      %s82 = sphi 0, %s84
      %s85 = sphi 0, %s82
      %s86 = sphi 0, %s85
      %s102 = sphi 0, %s86
      %s110 = sphi 0, %s112
      %s113 = sphi 0, %s110
      %s114 = sphi 0, %s113
      %s130 = sphi 0, %s114
      %s136 = sphi 0, %s138
      %s139 = sphi 0, %s136
      %s140 = sphi 0, %s139
      %s156 = sphi 0, %s140
      %s162 = sphi 0, %s164
      %s165 = sphi 0, %s162
      %s166 = sphi 0, %s165
      %s182 = sphi 0, %s166
      %s188 = sphi 0, %s190
      %s191 = sphi 0, %s188
      %s192 = sphi 0, %s191
      %s208 = sphi 0, %s192
      %s214 = sphi 0, %s216
      %s217 = sphi 0, %s214
      %s218 = sphi 0, %s217
      %s234 = sphi 0, %s218
      %s240 = sphi 0, %s242
      %s243 = sphi 0, %s240
      %s244 = sphi 0, %s243
      %s260 = sphi 0, %s244
      %s266 = sphi 0, %s268
      %s269 = sphi 0, %s266
      %s270 = sphi 0, %s269
      %s286 = sphi 0, %s270
      %s292 = sphi 0, %s294
      %s295 = sphi 0, %s292
      %s296 = sphi 0, %s295
      %s312 = sphi 0, %s296
      %s318 = sphi 0, %s320
      %s321 = sphi 0, %s318
      %s322 = sphi 0, %s321
      %s338 = sphi 0, %s322
      %s342 = sphi 0, %s342
      %s344 = sphi 0, %s342
      %s345 = sphi 0, %s344
      %s359 = sphi 0, %s345
      %s363 = sphi 0, %s363
      %s365 = sphi 0, %s363
      %s366 = sphi 0, %s365
      %s380 = sphi 0, %s366
      %s384 = sphi 0, %s384
      %s386 = sphi 0, %s384
      %s387 = sphi 0, %s386
      %s401 = sphi 0, %s387
      %s405 = sphi 0, %s405
      %s407 = sphi 0, %s405
      %s408 = sphi 0, %s407
      %s422 = sphi 0, %s408
      %s428 = sphi 0, %s430
      %s431 = sphi 0, %s428
      %s432 = sphi 0, %s431
      %s448 = sphi 0, %s432
    $region4: #{tpu_custom_call.1} parent=1 // loop_header_branch
      %37 = sbr.rel (%p35) target = $region8
    $region5: #{tpu_custom_call.1} parent=1 // loop_body
      %s39 = ssub.s32 %s34, 1
      %s40 = ssub.s32 %s34, 2
      %s47 = sadd.s32 1, %s42
      %p48 = scmp.ge.s32.totalorder %s47, 2
      %s49 = scalar_select %p48, 0, %s47
      %s50 = sadd.s32 1, %s41
      %s51 = scalar_select %p48, %s50, %s41
      %p52 = scmp.ge.s32.totalorder %s51, 2
      %s53 = scalar_select %p52, 0, %s51
      %s54 = ssub.s32 %s41, %s53
      %p55 = scmp.eq.s32.totalorder %s54, 0
      %s57 = sadd.s32 %s56, 1
      %s58 = scalar_select %p55, %s56, %s57
      %p61 = pneg %p55
      %p62 = scmp.eq.s32.totalorder %s34, 3
      %p63 = por %p61, %p62
      %p64 = scmp.ne.s32.totalorder %s56, %s59
      %p65 = scmp.eq.s32.totalorder %s34, 0
      %p66 = por %p64, %p65
      %p67 = scmp.ne.s32.totalorder %s56, %s59
      %p68 = scmp.eq.s32.totalorder %s39, 3
      %p69 = por %p67, %p68
      %p70 = scmp.ne.s32.totalorder %s59, %s60
      %p71 = scmp.eq.s32.totalorder %s39, 0
      %p72 = por %p70, %p71
      %p73 = scmp.ne.s32.totalorder %s59, %s60
      %p74 = scmp.eq.s32.totalorder %s40, 3
      %p75 = por %p73, %p74
      %p77 = scmp.ne.s32.totalorder %s60, %s76
      %p78 = scmp.eq.s32.totalorder %s40, 0
      %p79 = por %p77, %p78
      %s80 = ssub.s32 %s41, %s53
      %p81 = scmp.eq.s32.totalorder %s80, 0
      %s83 = sadd.s32 %s82, 1
      %s84 = scalar_select %p81, %s82, %s83
      %p87 = pneg %p81
      %p88 = scmp.eq.s32.totalorder %s34, 3
      %p89 = por %p87, %p88
      %p90 = scmp.ne.s32.totalorder %s82, %s85
      %p91 = scmp.eq.s32.totalorder %s34, 0
      %p92 = por %p90, %p91
      %p93 = scmp.ne.s32.totalorder %s82, %s85
      %p94 = scmp.eq.s32.totalorder %s39, 3
      %p95 = por %p93, %p94
      %p96 = scmp.ne.s32.totalorder %s85, %s86
      %p97 = scmp.eq.s32.totalorder %s39, 0
      %p98 = por %p96, %p97
      %p99 = scmp.ne.s32.totalorder %s85, %s86
      %p100 = scmp.eq.s32.totalorder %s40, 3
      %p101 = por %p99, %p100
      %p103 = scmp.ne.s32.totalorder %s86, %s102
      %p104 = scmp.eq.s32.totalorder %s40, 0
      %p105 = por %p103, %p104
      %s106 = ssub.s32 %s42, %s49
      %s107 = ssub.s32 %s41, %s53
      %s108 = sor.u32 %s106, %s107
      %p109 = scmp.eq.s32.totalorder %s108, 0
      %s111 = sadd.s32 %s110, 1
      %s112 = scalar_select %p109, %s110, %s111
      %p115 = pneg %p109
      %p116 = scmp.eq.s32.totalorder %s34, 3
      %p117 = por %p115, %p116
      %p118 = scmp.ne.s32.totalorder %s110, %s113
      %p119 = scmp.eq.s32.totalorder %s34, 0
      %p120 = por %p118, %p119
      %p121 = scmp.ne.s32.totalorder %s110, %s113
      %p122 = scmp.eq.s32.totalorder %s39, 3
      %p123 = por %p121, %p122
      %p124 = scmp.ne.s32.totalorder %s113, %s114
      %p125 = scmp.eq.s32.totalorder %s39, 0
      %p126 = por %p124, %p125
      %p127 = scmp.ne.s32.totalorder %s113, %s114
      %p128 = scmp.eq.s32.totalorder %s40, 3
      %p129 = por %p127, %p128
      %p131 = scmp.ne.s32.totalorder %s114, %s130
      %p132 = scmp.eq.s32.totalorder %s40, 0
      %p133 = por %p131, %p132
      %s134 = ssub.s32 %s42, %s49
      %p135 = scmp.eq.s32.totalorder %s134, 0
      %s137 = sadd.s32 %s136, 1
      %s138 = scalar_select %p135, %s136, %s137
      %p141 = pneg %p135
      %p142 = scmp.eq.s32.totalorder %s34, 3
      %p143 = por %p141, %p142
      %p144 = scmp.ne.s32.totalorder %s136, %s139
      %p145 = scmp.eq.s32.totalorder %s34, 0
      %p146 = por %p144, %p145
      %p147 = scmp.ne.s32.totalorder %s136, %s139
      %p148 = scmp.eq.s32.totalorder %s39, 3
      %p149 = por %p147, %p148
      %p150 = scmp.ne.s32.totalorder %s139, %s140
      %p151 = scmp.eq.s32.totalorder %s39, 0
      %p152 = por %p150, %p151
      %p153 = scmp.ne.s32.totalorder %s139, %s140
      %p154 = scmp.eq.s32.totalorder %s40, 3
      %p155 = por %p153, %p154
      %p157 = scmp.ne.s32.totalorder %s140, %s156
      %p158 = scmp.eq.s32.totalorder %s40, 0
      %p159 = por %p157, %p158
      %s160 = ssub.s32 %s42, %s49
      %p161 = scmp.eq.s32.totalorder %s160, 0
      %s163 = sadd.s32 %s162, 1
      %s164 = scalar_select %p161, %s162, %s163
      %p167 = pneg %p161
      %p168 = scmp.eq.s32.totalorder %s34, 3
      %p169 = por %p167, %p168
      %p170 = scmp.ne.s32.totalorder %s162, %s165
      %p171 = scmp.eq.s32.totalorder %s34, 0
      %p172 = por %p170, %p171
      %p173 = scmp.ne.s32.totalorder %s162, %s165
      %p174 = scmp.eq.s32.totalorder %s39, 3
      %p175 = por %p173, %p174
      %p176 = scmp.ne.s32.totalorder %s165, %s166
      %p177 = scmp.eq.s32.totalorder %s39, 0
      %p178 = por %p176, %p177
      %p179 = scmp.ne.s32.totalorder %s165, %s166
      %p180 = scmp.eq.s32.totalorder %s40, 3
      %p181 = por %p179, %p180
      %p183 = scmp.ne.s32.totalorder %s166, %s182
      %p184 = scmp.eq.s32.totalorder %s40, 0
      %p185 = por %p183, %p184
      %s186 = ssub.s32 %s42, %s49
      %p187 = scmp.eq.s32.totalorder %s186, 0
      %s189 = sadd.s32 %s188, 1
      %s190 = scalar_select %p187, %s188, %s189
      %p193 = pneg %p187
      %p194 = scmp.eq.s32.totalorder %s34, 3
      %p195 = por %p193, %p194
      %p196 = scmp.ne.s32.totalorder %s188, %s191
      %p197 = scmp.eq.s32.totalorder %s34, 0
      %p198 = por %p196, %p197
      %p199 = scmp.ne.s32.totalorder %s188, %s191
      %p200 = scmp.eq.s32.totalorder %s39, 3
      %p201 = por %p199, %p200
      %p202 = scmp.ne.s32.totalorder %s191, %s192
      %p203 = scmp.eq.s32.totalorder %s39, 0
      %p204 = por %p202, %p203
      %p205 = scmp.ne.s32.totalorder %s191, %s192
      %p206 = scmp.eq.s32.totalorder %s40, 3
      %p207 = por %p205, %p206
      %p209 = scmp.ne.s32.totalorder %s192, %s208
      %p210 = scmp.eq.s32.totalorder %s40, 0
      %p211 = por %p209, %p210
      %s212 = ssub.s32 %s42, %s49
      %p213 = scmp.eq.s32.totalorder %s212, 0
      %s215 = sadd.s32 %s214, 1
      %s216 = scalar_select %p213, %s214, %s215
      %p219 = pneg %p213
      %p220 = scmp.eq.s32.totalorder %s34, 3
      %p221 = por %p219, %p220
      %p222 = scmp.ne.s32.totalorder %s214, %s217
      %p223 = scmp.eq.s32.totalorder %s34, 0
      %p224 = por %p222, %p223
      %p225 = scmp.ne.s32.totalorder %s214, %s217
      %p226 = scmp.eq.s32.totalorder %s39, 3
      %p227 = por %p225, %p226
      %p228 = scmp.ne.s32.totalorder %s217, %s218
      %p229 = scmp.eq.s32.totalorder %s39, 0
      %p230 = por %p228, %p229
      %p231 = scmp.ne.s32.totalorder %s217, %s218
      %p232 = scmp.eq.s32.totalorder %s40, 3
      %p233 = por %p231, %p232
      %p235 = scmp.ne.s32.totalorder %s218, %s234
      %p236 = scmp.eq.s32.totalorder %s40, 0
      %p237 = por %p235, %p236
      %s238 = ssub.s32 %s42, %s49
      %p239 = scmp.eq.s32.totalorder %s238, 0
      %s241 = sadd.s32 %s240, 1
      %s242 = scalar_select %p239, %s240, %s241
      %p245 = pneg %p239
      %p246 = scmp.eq.s32.totalorder %s34, 3
      %p247 = por %p245, %p246
      %p248 = scmp.ne.s32.totalorder %s240, %s243
      %p249 = scmp.eq.s32.totalorder %s34, 0
      %p250 = por %p248, %p249
      %p251 = scmp.ne.s32.totalorder %s240, %s243
      %p252 = scmp.eq.s32.totalorder %s39, 3
      %p253 = por %p251, %p252
      %p254 = scmp.ne.s32.totalorder %s243, %s244
      %p255 = scmp.eq.s32.totalorder %s39, 0
      %p256 = por %p254, %p255
      %p257 = scmp.ne.s32.totalorder %s243, %s244
      %p258 = scmp.eq.s32.totalorder %s40, 3
      %p259 = por %p257, %p258
      %p261 = scmp.ne.s32.totalorder %s244, %s260
      %p262 = scmp.eq.s32.totalorder %s40, 0
      %p263 = por %p261, %p262
      %s264 = ssub.s32 %s42, %s49
      %p265 = scmp.eq.s32.totalorder %s264, 0
      %s267 = sadd.s32 %s266, 1
      %s268 = scalar_select %p265, %s266, %s267
      %p271 = pneg %p265
      %p272 = scmp.eq.s32.totalorder %s34, 3
      %p273 = por %p271, %p272
      %p274 = scmp.ne.s32.totalorder %s266, %s269
      %p275 = scmp.eq.s32.totalorder %s34, 0
      %p276 = por %p274, %p275
      %p277 = scmp.ne.s32.totalorder %s266, %s269
      %p278 = scmp.eq.s32.totalorder %s39, 3
      %p279 = por %p277, %p278
      %p280 = scmp.ne.s32.totalorder %s269, %s270
      %p281 = scmp.eq.s32.totalorder %s39, 0
      %p282 = por %p280, %p281
      %p283 = scmp.ne.s32.totalorder %s269, %s270
      %p284 = scmp.eq.s32.totalorder %s40, 3
      %p285 = por %p283, %p284
      %p287 = scmp.ne.s32.totalorder %s270, %s286
      %p288 = scmp.eq.s32.totalorder %s40, 0
      %p289 = por %p287, %p288
      %s290 = ssub.s32 %s42, %s49
      %p291 = scmp.eq.s32.totalorder %s290, 0
      %s293 = sadd.s32 %s292, 1
      %s294 = scalar_select %p291, %s292, %s293
      %p297 = pneg %p291
      %p298 = scmp.eq.s32.totalorder %s34, 3
      %p299 = por %p297, %p298
      %p300 = scmp.ne.s32.totalorder %s292, %s295
      %p301 = scmp.eq.s32.totalorder %s34, 0
      %p302 = por %p300, %p301
      %p303 = scmp.ne.s32.totalorder %s292, %s295
      %p304 = scmp.eq.s32.totalorder %s39, 3
      %p305 = por %p303, %p304
      %p306 = scmp.ne.s32.totalorder %s295, %s296
      %p307 = scmp.eq.s32.totalorder %s39, 0
      %p308 = por %p306, %p307
      %p309 = scmp.ne.s32.totalorder %s295, %s296
      %p310 = scmp.eq.s32.totalorder %s40, 3
      %p311 = por %p309, %p310
      %p313 = scmp.ne.s32.totalorder %s296, %s312
      %p314 = scmp.eq.s32.totalorder %s40, 0
      %p315 = por %p313, %p314
      %s316 = ssub.s32 %s42, %s49
      %p317 = scmp.eq.s32.totalorder %s316, 0
      %s319 = sadd.s32 %s318, 1
      %s320 = scalar_select %p317, %s318, %s319
      %p323 = pneg %p317
      %p324 = scmp.eq.s32.totalorder %s34, 3
      %p325 = por %p323, %p324
      %p326 = scmp.ne.s32.totalorder %s318, %s321
      %p327 = scmp.eq.s32.totalorder %s34, 0
      %p328 = por %p326, %p327
      %p329 = scmp.ne.s32.totalorder %s318, %s321
      %p330 = scmp.eq.s32.totalorder %s39, 3
      %p331 = por %p329, %p330
      %p332 = scmp.ne.s32.totalorder %s321, %s322
      %p333 = scmp.eq.s32.totalorder %s39, 0
      %p334 = por %p332, %p333
      %p335 = scmp.ne.s32.totalorder %s321, %s322
      %p336 = scmp.eq.s32.totalorder %s40, 3
      %p337 = por %p335, %p336
      %p339 = scmp.ne.s32.totalorder %s322, %s338
      %p340 = scmp.eq.s32.totalorder %s40, 0
      %p341 = por %p339, %p340
      %s343 = sadd.s32 %s342, 1
      %p346 = scmp.eq.s32.totalorder %s34, 3
      %p347 = scmp.ne.s32.totalorder %s342, %s344
      %p348 = scmp.eq.s32.totalorder %s34, 0
      %p349 = por %p347, %p348
      %p350 = scmp.ne.s32.totalorder %s342, %s344
      %p351 = scmp.eq.s32.totalorder %s39, 3
      %p352 = por %p350, %p351
      %p353 = scmp.ne.s32.totalorder %s344, %s345
      %p354 = scmp.eq.s32.totalorder %s39, 0
      %p355 = por %p353, %p354
      %p356 = scmp.ne.s32.totalorder %s344, %s345
      %p357 = scmp.eq.s32.totalorder %s40, 3
      %p358 = por %p356, %p357
      %p360 = scmp.ne.s32.totalorder %s345, %s359
      %p361 = scmp.eq.s32.totalorder %s40, 0
      %p362 = por %p360, %p361
      %s364 = sadd.s32 %s363, 1
      %p367 = scmp.eq.s32.totalorder %s34, 3
      %p368 = scmp.ne.s32.totalorder %s363, %s365
      %p369 = scmp.eq.s32.totalorder %s34, 0
      %p370 = por %p368, %p369
      %p371 = scmp.ne.s32.totalorder %s363, %s365
      %p372 = scmp.eq.s32.totalorder %s39, 3
      %p373 = por %p371, %p372
      %p374 = scmp.ne.s32.totalorder %s365, %s366
      %p375 = scmp.eq.s32.totalorder %s39, 0
      %p376 = por %p374, %p375
      %p377 = scmp.ne.s32.totalorder %s365, %s366
      %p378 = scmp.eq.s32.totalorder %s40, 3
      %p379 = por %p377, %p378
      %p381 = scmp.ne.s32.totalorder %s366, %s380
      %p382 = scmp.eq.s32.totalorder %s40, 0
      %p383 = por %p381, %p382
      %s385 = sadd.s32 %s384, 1
      %p388 = scmp.eq.s32.totalorder %s34, 3
      %p389 = scmp.ne.s32.totalorder %s384, %s386
      %p390 = scmp.eq.s32.totalorder %s34, 0
      %p391 = por %p389, %p390
      %p392 = scmp.ne.s32.totalorder %s384, %s386
      %p393 = scmp.eq.s32.totalorder %s39, 3
      %p394 = por %p392, %p393
      %p395 = scmp.ne.s32.totalorder %s386, %s387
      %p396 = scmp.eq.s32.totalorder %s39, 0
      %p397 = por %p395, %p396
      %p398 = scmp.ne.s32.totalorder %s386, %s387
      %p399 = scmp.eq.s32.totalorder %s40, 3
      %p400 = por %p398, %p399
      %p402 = scmp.ne.s32.totalorder %s387, %s401
      %p403 = scmp.eq.s32.totalorder %s40, 0
      %p404 = por %p402, %p403
      %s406 = sadd.s32 %s405, 1
      %p409 = scmp.eq.s32.totalorder %s34, 3
      %p410 = scmp.ne.s32.totalorder %s405, %s407
      %p411 = scmp.eq.s32.totalorder %s34, 0
      %p412 = por %p410, %p411
      %p413 = scmp.ne.s32.totalorder %s405, %s407
      %p414 = scmp.eq.s32.totalorder %s39, 3
      %p415 = por %p413, %p414
      %p416 = scmp.ne.s32.totalorder %s407, %s408
      %p417 = scmp.eq.s32.totalorder %s39, 0
      %p418 = por %p416, %p417
      %p419 = scmp.ne.s32.totalorder %s407, %s408
      %p420 = scmp.eq.s32.totalorder %s40, 3
      %p421 = por %p419, %p420
      %p423 = scmp.ne.s32.totalorder %s408, %s422
      %p424 = scmp.eq.s32.totalorder %s40, 0
      %p425 = por %p423, %p424
      %s426 = ssub.s32 %s41, %s53
      %p427 = scmp.eq.s32.totalorder %s426, 0
      %s429 = sadd.s32 %s428, 1
      %s430 = scalar_select %p427, %s428, %s429
      %p433 = pneg %p427
      %p434 = scmp.eq.s32.totalorder %s34, 3
      %p435 = por %p433, %p434
      %p436 = scmp.ne.s32.totalorder %s428, %s431
      %p437 = scmp.eq.s32.totalorder %s34, 0
      %p438 = por %p436, %p437
      %p439 = scmp.ne.s32.totalorder %s428, %s431
      %p440 = scmp.eq.s32.totalorder %s39, 3
      %p441 = por %p439, %p440
      %p442 = scmp.ne.s32.totalorder %s431, %s432
      %p443 = scmp.eq.s32.totalorder %s39, 0
      %p444 = por %p442, %p443
      %p445 = scmp.ne.s32.totalorder %s431, %s432
      %p446 = scmp.eq.s32.totalorder %s40, 3
      %p447 = por %p445, %p446
      %p449 = scmp.ne.s32.totalorder %s432, %s448
      %p450 = scmp.eq.s32.totalorder %s40, 0
      %p451 = por %p449, %p450
      %p452 = scmp.le.s32.totalorder 1, %s34
      %p453 = scmp.lt.s32.totalorder %s34, 5
      %p454 = pnand %p452, %p453
      %p455 = pneg %p454
      // Predicated region
      $region9: #{tpu_custom_call.1} parent=5 // pred_check
        _
      $region10: #{tpu_custom_call.1} parent=5 // pred_check_branch
        %457 = sbr.rel (%p454) target = $region12
      $region11: #{tpu_custom_call.1} parent=5 // pred_region
        %s458 = ssub.s32 %s34, 1
        // Predicated region
        $region13: #{tpu_custom_call.1} parent=11 // pred_check
          %p459 = pneg %p355
        $region14: #{tpu_custom_call.1} parent=11 // pred_check_branch
          %461 = sbr.rel (%p459) target = $region16
        $region15: #{tpu_custom_call.1} parent=11 // pred_region
          _
        $region16: #{tpu_custom_call.1} parent=11 // pred_fallthru
          _
        // Predicated region
        $region17: #{tpu_custom_call.1} parent=11 // pred_check
          %p462 = pneg %p376
        $region18: #{tpu_custom_call.1} parent=11 // pred_check_branch
          %464 = sbr.rel (%p462) target = $region20
        $region19: #{tpu_custom_call.1} parent=11 // pred_region
          _
        $region20: #{tpu_custom_call.1} parent=11 // pred_fallthru
          _
        // Predicated region
        $region21: #{tpu_custom_call.1} parent=11 // pred_check
          %p465 = pneg %p397
        $region22: #{tpu_custom_call.1} parent=11 // pred_check_branch
          %467 = sbr.rel (%p465) target = $region24
        $region23: #{tpu_custom_call.1} parent=11 // pred_region
          %469 = vsyncadd [#allocation13], 0
          %s470 = sshll.u32 %s13, 4
          %s471 = int_to_ptr.hbm [resolvable:$true] %s470
          %s472 = sshll.u32 [#allocation12], 4
          %s473 = int_to_ptr.vmem [resolvable:$true] %s472
          %478 = dma.hbm_to_vmem [thread:$0]  %s471, 512, %s473, [#allocation13], 128, 128, 8
        $region24: #{tpu_custom_call.1} parent=11 // pred_fallthru
          _
        // Predicated region
        $region25: #{tpu_custom_call.1} parent=11 // pred_check
          %p479 = pneg %p418
        $region26: #{tpu_custom_call.1} parent=11 // pred_check_branch
          %481 = sbr.rel (%p479) target = $region28
        $region27: #{tpu_custom_call.1} parent=11 // pred_region
          _
        $region28: #{tpu_custom_call.1} parent=11 // pred_fallthru
          _
      $region12: #{tpu_custom_call.1} parent=5 // pred_fallthru
        _
      %p482 = scmp.lt.s32.totalorder %s34, 4
      // Predicated region
      $region29: #{tpu_custom_call.1} parent=5 // pred_check
        %p483 = pneg %p482
      $region30: #{tpu_custom_call.1} parent=5 // pred_check_branch
        %485 = sbr.rel (%p483) target = $region32
      $region31: #{tpu_custom_call.1} parent=5 // pred_region
        // Predicated region
        $region33: #{tpu_custom_call.1} parent=31 // pred_check
          %p486 = pneg %p66
        $region34: #{tpu_custom_call.1} parent=31 // pred_check_branch
          %488 = sbr.rel (%p486) target = $region36
        $region35: #{tpu_custom_call.1} parent=31 // pred_region
          %s489 = sand.u32 %s56, 1
          %s490 = scalar_lea.sflag [#allocation4], %s489
          %s491 = sand.u32 %s56, 1
          %s492 = smul.addr %s491, 8
          %s493 = scalar_lea.vmem [#allocation3], %s492
          %495 = vsyncadd %s490, 0
          %s496 = smul.addr %s41, 8
          %s497 = scalar_lea.hbm %s0, %s496
          %s499 = sshll.u32 %s497, 4
          %s500 = int_to_ptr.hbm [resolvable:$true] %s499
          %s501 = sshll.u32 %s493, 4
          %s502 = int_to_ptr.vmem [resolvable:$true] %s501
          %504 = dma.hbm_to_vmem [thread:$0]  %s500, 128, %s502, %s490
        $region36: #{tpu_custom_call.1} parent=31 // pred_fallthru
          _
        // Predicated region
        $region37: #{tpu_custom_call.1} parent=31 // pred_check
          %p505 = pneg %p92
        $region38: #{tpu_custom_call.1} parent=31 // pred_check_branch
          %507 = sbr.rel (%p505) target = $region40
        $region39: #{tpu_custom_call.1} parent=31 // pred_region
          %s508 = sand.u32 %s34, 1
          %s509 = scalar_lea.sflag [#allocation7], %s508
          %s510 = sand.u32 %s82, 1
          %s511 = smul.addr %s510, 8
          %s512 = scalar_lea.vmem [#allocation6], %s511
          %514 = vsyncadd %s509, 0
          %s515 = smul.addr %s41, 8
          %s516 = scalar_lea.hbm %s1, %s515
          %s518 = sshll.u32 %s516, 4
          %s519 = int_to_ptr.hbm [resolvable:$true] %s518
          %s520 = sshll.u32 %s512, 4
          %s521 = int_to_ptr.vmem [resolvable:$true] %s520
          %523 = dma.hbm_to_vmem [thread:$0]  %s519, 128, %s521, %s509
        $region40: #{tpu_custom_call.1} parent=31 // pred_fallthru
          _
        // Predicated region
        $region41: #{tpu_custom_call.1} parent=31 // pred_check
          %p524 = pneg %p120
        $region42: #{tpu_custom_call.1} parent=31 // pred_check_branch
          %526 = sbr.rel (%p524) target = $region44
        $region43: #{tpu_custom_call.1} parent=31 // pred_region
          %s527 = sand.u32 %s34, 1
          %s528 = scalar_lea.sflag [#allocation7], %s527
          %s529 = sand.u32 %s110, 1
          %s530 = smul.addr %s529, 8
          %s531 = scalar_lea.vmem [#allocation8], %s530
          %533 = vsyncadd %s528, 0
          %s534 = smul.addr %s42, 2
          %s535 = sadd.s32 %s41, %s534
          %s536 = smul.addr %s535, 8
          %s537 = scalar_lea.hbm %s2, %s536
          %s539 = sshll.u32 %s537, 4
          %s540 = int_to_ptr.hbm [resolvable:$true] %s539
          %s541 = sshll.u32 %s531, 4
          %s542 = int_to_ptr.vmem [resolvable:$true] %s541
          %544 = dma.hbm_to_vmem [thread:$0]  %s540, 128, %s542, %s528
        $region44: #{tpu_custom_call.1} parent=31 // pred_fallthru
          _
        // Predicated region
        $region45: #{tpu_custom_call.1} parent=31 // pred_check
          %p545 = pneg %p146
        $region46: #{tpu_custom_call.1} parent=31 // pred_check_branch
          %547 = sbr.rel (%p545) target = $region48
        $region47: #{tpu_custom_call.1} parent=31 // pred_region
          %p548 = scmp.lt.s32.totalorder %s42, 1
          %s549 = scalar_select %p548, %s42, 1
          %s550 = smul.addr %s549, 4
          %s551 = smul.addr %s550, 8
          %s552 = scalar_lea.vmem %s3, %s551
        $region48: #{tpu_custom_call.1} parent=31 // pred_fallthru
          _
        // Predicated region
        $region49: #{tpu_custom_call.1} parent=31 // pred_check
          %p553 = pneg %p172
        $region50: #{tpu_custom_call.1} parent=31 // pred_check_branch
          %555 = sbr.rel (%p553) target = $region52
        $region51: #{tpu_custom_call.1} parent=31 // pred_region
          %p556 = scmp.lt.s32.totalorder %s42, 1
          %s557 = scalar_select %p556, %s42, 1
          %s558 = smul.addr %s557, 4
          %s559 = smul.addr %s558, 8
          %s560 = scalar_lea.vmem %s4, %s559
        $region52: #{tpu_custom_call.1} parent=31 // pred_fallthru
          _
        // Predicated region
        $region53: #{tpu_custom_call.1} parent=31 // pred_check
          %p561 = pneg %p198
        $region54: #{tpu_custom_call.1} parent=31 // pred_check_branch
          %563 = sbr.rel (%p561) target = $region56
        $region55: #{tpu_custom_call.1} parent=31 // pred_region
          %p564 = scmp.lt.s32.totalorder %s42, 1
          %s565 = scalar_select %p564, %s42, 1
          %s566 = smul.addr %s565, 4
          %s567 = smul.addr %s566, 8
          %s568 = scalar_lea.vmem %s5, %s567
        $region56: #{tpu_custom_call.1} parent=31 // pred_fallthru
          _
        // Predicated region
        $region57: #{tpu_custom_call.1} parent=31 // pred_check
          %p569 = pneg %p224
        $region58: #{tpu_custom_call.1} parent=31 // pred_check_branch
          %571 = sbr.rel (%p569) target = $region60
        $region59: #{tpu_custom_call.1} parent=31 // pred_region
          %s572 = sand.u32 %s34, 1
          %s573 = scalar_lea.sflag [#allocation10], %s572
          %s574 = sand.u32 %s214, 1
          %s575 = smul.addr %s574, 32
          %s576 = scalar_lea.vmem [#allocation9], %s575
          %578 = vsyncadd %s573, 0
          %s579 = smul.addr %s42, 4
          %s580 = smul.addr %s579, 8
          %s581 = scalar_lea.hbm %s6, %s580
          %s582 = sshll.u32 %s581, 4
          %s583 = int_to_ptr.hbm [resolvable:$true] %s582
          %s584 = sshll.u32 %s576, 4
          %s585 = int_to_ptr.vmem [resolvable:$true] %s584
          %590 = dma.hbm_to_vmem [thread:$0]  %s583, 512, %s585, %s573, 128, 128, 8
        $region60: #{tpu_custom_call.1} parent=31 // pred_fallthru
          _
        // Predicated region
        $region61: #{tpu_custom_call.1} parent=31 // pred_check
          %p591 = pneg %p250
        $region62: #{tpu_custom_call.1} parent=31 // pred_check_branch
          %593 = sbr.rel (%p591) target = $region64
        $region63: #{tpu_custom_call.1} parent=31 // pred_region
          %s594 = sand.u32 %s34, 1
          %s595 = scalar_lea.sflag [#allocation10], %s594
          %s596 = sand.u32 %s240, 1
          %s597 = smul.addr %s596, 32
          %s598 = scalar_lea.vmem [#allocation11], %s597
          %600 = vsyncadd %s595, 0
          %s601 = smul.addr %s42, 4
          %s602 = smul.addr %s601, 8
          %s603 = scalar_lea.hbm %s7, %s602
          %s604 = sshll.u32 %s603, 4
          %s605 = int_to_ptr.hbm [resolvable:$true] %s604
          %s606 = sshll.u32 %s598, 4
          %s607 = int_to_ptr.vmem [resolvable:$true] %s606
          %612 = dma.hbm_to_vmem [thread:$0]  %s605, 512, %s607, %s595, 128, 128, 8
        $region64: #{tpu_custom_call.1} parent=31 // pred_fallthru
          _
        // Predicated region
        $region65: #{tpu_custom_call.1} parent=31 // pred_check
          %p613 = pneg %p276
        $region66: #{tpu_custom_call.1} parent=31 // pred_check_branch
          %615 = sbr.rel (%p613) target = $region68
        $region67: #{tpu_custom_call.1} parent=31 // pred_region
          %p616 = scmp.lt.s32.totalorder %s42, 1
          %s617 = scalar_select %p616, %s42, 1
          %s618 = scalar_lea.vmem %s8, %s617
        $region68: #{tpu_custom_call.1} parent=31 // pred_fallthru
          _
        // Predicated region
        $region69: #{tpu_custom_call.1} parent=31 // pred_check
          %p619 = pneg %p302
        $region70: #{tpu_custom_call.1} parent=31 // pred_check_branch
          %621 = sbr.rel (%p619) target = $region72
        $region71: #{tpu_custom_call.1} parent=31 // pred_region
          %p622 = scmp.lt.s32.totalorder %s42, 1
          %s623 = scalar_select %p622, %s42, 1
          %s624 = smul.addr %s623, 8
          %s625 = smul.addr %s624, 8
          %s626 = scalar_lea.vmem %s9, %s625
        $region72: #{tpu_custom_call.1} parent=31 // pred_fallthru
          _
        // Predicated region
        $region73: #{tpu_custom_call.1} parent=31 // pred_check
          %p627 = pneg %p328
        $region74: #{tpu_custom_call.1} parent=31 // pred_check_branch
          %629 = sbr.rel (%p627) target = $region76
        $region75: #{tpu_custom_call.1} parent=31 // pred_region
          %p630 = scmp.lt.s32.totalorder %s42, 1
          %s631 = scalar_select %p630, %s42, 1
          %s632 = scalar_lea.vmem %s10, %s631
        $region76: #{tpu_custom_call.1} parent=31 // pred_fallthru
          _
      $region32: #{tpu_custom_call.1} parent=5 // pred_fallthru
        _
      %p633 = scmp.le.s32.totalorder 1, %s34
      %p634 = scmp.lt.s32.totalorder %s34, 5
      %p635 = pnand %p633, %p634
      %p636 = pneg %p635
      // Predicated region
      $region77: #{tpu_custom_call.1} parent=5 // pred_check
        _
      $region78: #{tpu_custom_call.1} parent=5 // pred_check_branch
        %638 = sbr.rel (%p635) target = $region80
      $region79: #{tpu_custom_call.1} parent=5 // pred_region
        %s639 = ssub.s32 %s34, 1
        %s640 = sand.u32 %s59, 1
        %s641 = scalar_lea.sflag [#allocation4], %s640
        %s642 = sand.u32 %s59, 1
        %s643 = smul.addr %s642, 8
        %s644 = scalar_lea.vmem [#allocation3], %s643
        // Predicated region
        $region81: #{tpu_custom_call.1} parent=79 // pred_check
          %p645 = pneg %p72
        $region82: #{tpu_custom_call.1} parent=79 // pred_check_branch
          %647 = sbr.rel (%p645) target = $region84
        $region83: #{tpu_custom_call.1} parent=79 // pred_region
          %649 = dma.done %s641, 128
        $region84: #{tpu_custom_call.1} parent=79 // pred_fallthru
          _
        %s650 = sand.u32 %s39, 1
        %s651 = scalar_lea.sflag [#allocation7], %s650
        %s652 = sand.u32 %s85, 1
        %s653 = smul.addr %s652, 8
        %s654 = scalar_lea.vmem [#allocation6], %s653
        // Predicated region
        $region85: #{tpu_custom_call.1} parent=79 // pred_check
          %p655 = pneg %p98
        $region86: #{tpu_custom_call.1} parent=79 // pred_check_branch
          %657 = sbr.rel (%p655) target = $region88
        $region87: #{tpu_custom_call.1} parent=79 // pred_region
          %659 = dma.done %s651, 128
        $region88: #{tpu_custom_call.1} parent=79 // pred_fallthru
          _
        %s660 = sand.u32 %s39, 1
        %s661 = scalar_lea.sflag [#allocation7], %s660
        %s662 = sand.u32 %s113, 1
        %s663 = smul.addr %s662, 8
        %s664 = scalar_lea.vmem [#allocation8], %s663
        // Predicated region
        $region89: #{tpu_custom_call.1} parent=79 // pred_check
          %p665 = pneg %p126
        $region90: #{tpu_custom_call.1} parent=79 // pred_check_branch
          %667 = sbr.rel (%p665) target = $region92
        $region91: #{tpu_custom_call.1} parent=79 // pred_region
          %669 = dma.done %s661, 128
        $region92: #{tpu_custom_call.1} parent=79 // pred_fallthru
          _
        %s670 = sand.u32 %s39, 1
        %s671 = scalar_lea.sflag [#allocation10], %s670
        %s672 = sand.u32 %s217, 1
        %s673 = smul.addr %s672, 32
        %s674 = scalar_lea.vmem [#allocation9], %s673
        // Predicated region
        $region93: #{tpu_custom_call.1} parent=79 // pred_check
          %p675 = pneg %p230
        $region94: #{tpu_custom_call.1} parent=79 // pred_check_branch
          %677 = sbr.rel (%p675) target = $region96
        $region95: #{tpu_custom_call.1} parent=79 // pred_region
          %679 = dma.done %s671, 512
        $region96: #{tpu_custom_call.1} parent=79 // pred_fallthru
          _
        %s680 = sand.u32 %s39, 1
        %s681 = scalar_lea.sflag [#allocation10], %s680
        %s682 = sand.u32 %s243, 1
        %s683 = smul.addr %s682, 32
        %s684 = scalar_lea.vmem [#allocation11], %s683
        // Predicated region
        $region97: #{tpu_custom_call.1} parent=79 // pred_check
          %p685 = pneg %p256
        $region98: #{tpu_custom_call.1} parent=79 // pred_check_branch
          %687 = sbr.rel (%p685) target = $region100
        $region99: #{tpu_custom_call.1} parent=79 // pred_region
          %689 = dma.done %s681, 512
        $region100: #{tpu_custom_call.1} parent=79 // pred_fallthru
          _
        // Predicated region
        $region101: #{tpu_custom_call.1} parent=79 // pred_check
          %p690 = pneg %p397
        $region102: #{tpu_custom_call.1} parent=79 // pred_check_branch
          %692 = sbr.rel (%p690) target = $region104
        $region103: #{tpu_custom_call.1} parent=79 // pred_region
          %694 = dma.done [#allocation13], 512
        $region104: #{tpu_custom_call.1} parent=79 // pred_fallthru
          _
        %s695 = sand.u32 %s59, 1
        %s696 = scalar_lea.sflag [#allocation4], %s695
        %s697 = sand.u32 %s59, 1
        %s698 = smul.addr %s697, 8
        %s699 = scalar_lea.vmem [#allocation3], %s698
        %p700 = pneg %p72
        %p701 = pneg %p69
        %s702 = sand.u32 %s39, 1
        %s703 = scalar_lea.sflag [#allocation7], %s702
        %s704 = sand.u32 %s85, 1
        %s705 = smul.addr %s704, 8
        %s706 = scalar_lea.vmem [#allocation6], %s705
        %p707 = pneg %p98
        %p708 = pneg %p95
        %s709 = sand.u32 %s39, 1
        %s710 = scalar_lea.sflag [#allocation7], %s709
        %s711 = sand.u32 %s113, 1
        %s712 = smul.addr %s711, 8
        %s713 = scalar_lea.vmem [#allocation8], %s712
        %p714 = pneg %p126
        %p715 = pneg %p123
        %p716 = scmp.lt.s32.totalorder %s44, 1
        %s717 = scalar_select %p716, %s44, 1
        %s718 = smul.addr %s717, 4
        %s719 = smul.addr %s718, 8
        %s720 = scalar_lea.vmem %s3, %s719
        %p721 = pneg %p152
        %p722 = pneg %p149
        %p723 = scmp.lt.s32.totalorder %s44, 1
        %s724 = scalar_select %p723, %s44, 1
        %s725 = smul.addr %s724, 4
        %s726 = smul.addr %s725, 8
        %s727 = scalar_lea.vmem %s4, %s726
        %p728 = pneg %p178
        %p729 = pneg %p175
        %p730 = scmp.lt.s32.totalorder %s44, 1
        %s731 = scalar_select %p730, %s44, 1
        %s732 = smul.addr %s731, 4
        %s733 = smul.addr %s732, 8
        %s734 = scalar_lea.vmem %s5, %s733
        %p735 = pneg %p204
        %p736 = pneg %p201
        %s737 = sand.u32 %s39, 1
        %s738 = scalar_lea.sflag [#allocation10], %s737
        %s739 = sand.u32 %s217, 1
        %s740 = smul.addr %s739, 32
        %s741 = scalar_lea.vmem [#allocation9], %s740
        %p742 = pneg %p230
        %p743 = pneg %p227
        %s744 = sand.u32 %s39, 1
        %s745 = scalar_lea.sflag [#allocation10], %s744
        %s746 = sand.u32 %s243, 1
        %s747 = smul.addr %s746, 32
        %s748 = scalar_lea.vmem [#allocation11], %s747
        %p749 = pneg %p256
        %p750 = pneg %p253
        %p751 = scmp.lt.s32.totalorder %s44, 1
        %s752 = scalar_select %p751, %s44, 1
        %s753 = scalar_lea.vmem %s8, %s752
        %p754 = pneg %p282
        %p755 = pneg %p279
        %p756 = scmp.lt.s32.totalorder %s44, 1
        %s757 = scalar_select %p756, %s44, 1
        %s758 = smul.addr %s757, 8
        %s759 = smul.addr %s758, 8
        %s760 = scalar_lea.vmem %s9, %s759
        %p761 = pneg %p308
        %p762 = pneg %p305
        %p763 = scmp.lt.s32.totalorder %s44, 1
        %s764 = scalar_select %p763, %s44, 1
        %s765 = scalar_lea.vmem %s10, %s764
        %p766 = pneg %p334
        %p767 = pneg %p331
        %p768 = pneg %p355
        %p769 = pneg %p352
        %p770 = pneg %p376
        %p771 = pneg %p373
        %p772 = pneg %p397
        %p773 = pneg %p394
        %p774 = pneg %p418
        %p775 = pneg %p415
        %p776 = pneg %p444
        %p777 = pneg %p441
        %s778 = sand.u32 %s431, 1
        %s779 = scalar_lea.sflag [#allocation5], %s778
        %s780 = sand.u32 %s431, 1
        %s781 = smul.addr %s780, 8
        %s782 = scalar_lea.vmem [#allocation14], %s781
        %p783 = scmp.lt.s32.totalorder %s44, 1
        %s784 = scalar_select %p783, %s44, 1
        %s785 = smul.addr %s784, 4
        %s786 = smul.addr %s785, 8
        %s787 = scalar_lea.vmem %s3, %s786
        %p788 = scmp.lt.s32.totalorder %s44, 1
        %s789 = scalar_select %p788, %s44, 1
        %s790 = smul.addr %s789, 4
        %s791 = smul.addr %s790, 8
        %s792 = scalar_lea.vmem %s4, %s791
        %p793 = scmp.lt.s32.totalorder %s44, 1
        %s794 = scalar_select %p793, %s44, 1
        %s795 = smul.addr %s794, 4
        %s796 = smul.addr %s795, 8
        %s797 = scalar_lea.vmem %s5, %s796
        %p798 = scmp.lt.s32.totalorder %s44, 1
        %s799 = scalar_select %p798, %s44, 1
        %s800 = scalar_lea.vmem %s8, %s799
        %p801 = scmp.lt.s32.totalorder %s44, 1
        %s802 = scalar_select %p801, %s44, 1
        %s803 = smul.addr %s802, 8
        %s804 = smul.addr %s803, 8
        %s805 = scalar_lea.vmem %s9, %s804
        %p806 = scmp.lt.s32.totalorder %s44, 1
        %s807 = scalar_select %p806, %s44, 1
        %s808 = scalar_lea.vmem %s10, %s807
        %p809 = scmp.eq.s32.totalorder %s44, 0
        // Predicated region
        $region105: #{tpu_custom_call.1} parent=79 // pred_check
          %p810 = pneg %p809
        $region106: #{tpu_custom_call.1} parent=79 // pred_check_branch
          %812 = sbr.rel (%p810) target = $region108
        $region107: #{tpu_custom_call.1} parent=79 // pred_region
          %v813 = vld [vmem:[%s644] sm:$0xff]
          %vm814 = vcmask 261120
          %815 = vst.msk [vmem:[#allocation2] sm:$0xff] %vm814, %v813
        $region108: #{tpu_custom_call.1} parent=79 // pred_fallthru
          _
        %v816 = vld [vmem:[#allocation2] sm:$0xff]
        %v817 = vld [vmem:[%s654] sm:$0xff]
        %v818 = vld [vmem:[%s664] sm:$0xff]
        %v819 = vld [vmem:[%s787] sm:$0xff]
        %v820 = vld [vmem:[%s787 + $0x8] sm:$0xff]
        %v821 = vld [vmem:[%s787 + $0x10] sm:$0xff]
        %v822 = vld [vmem:[%s787 + $0x18] sm:$0xff]
        %vm823 = vcmask 261120
        %v825 = vsel %vm823, %v816, 0
        %827 = vmatpush.msra.mxu0 0.0
        %828 = vmatpush.msra.mxu0 0.0
        %829 = vmatpush.msra.mxu0 0.0
        %830 = vmatpush.msra.mxu0 0.0
        %831 = vmatpush.msra.mxu0 0.0
        %832 = vmatpush.msra.mxu0 0.0
        %833 = vmatpush.msra.mxu0 0.0
        %834 = vmatpush.msra.mxu0 0.0
        %835 = vmatpush.msra.mxu0 0.0
        %836 = vmatpush.msra.mxu0 0.0
        %837 = vmatpush.msra.mxu0 0.0
        %838 = vmatpush.msra.mxu0 0.0
        %839 = vmatpush.msra.mxu0 %v822
        %840 = vmatpush.msra.mxu0 %v821
        %841 = vmatpush.msra.mxu0 %v820
        %842 = vmatpush.msra.mxu0 %v819
        %843 = vmatmul.f32.gmra.mxu0 %v825
        %v844 = vpop.f32.mrf.mxu0
        %v845 = vadd.f32 0.0, %v844
        %846 = vdwg.mxu0
        %v847 = vld [vmem:[%s792] sm:$0xff]
        %v848 = vld [vmem:[%s792 + $0x8] sm:$0xff]
        %v849 = vld [vmem:[%s792 + $0x10] sm:$0xff]
        %v850 = vld [vmem:[%s792 + $0x18] sm:$0xff]
        %v852 = vsel %vm823, %v817, 0
        %854 = vmatpush.msra.mxu0 0.0
        %855 = vmatpush.msra.mxu0 0.0
        %856 = vmatpush.msra.mxu0 0.0
        %857 = vmatpush.msra.mxu0 0.0
        %858 = vmatpush.msra.mxu0 0.0
        %859 = vmatpush.msra.mxu0 0.0
        %860 = vmatpush.msra.mxu0 0.0
        %861 = vmatpush.msra.mxu0 0.0
        %862 = vmatpush.msra.mxu0 0.0
        %863 = vmatpush.msra.mxu0 0.0
        %864 = vmatpush.msra.mxu0 0.0
        %865 = vmatpush.msra.mxu0 0.0
        %866 = vmatpush.msra.mxu0 %v850
        %867 = vmatpush.msra.mxu0 %v849
        %868 = vmatpush.msra.mxu0 %v848
        %869 = vmatpush.msra.mxu0 %v847
        %870 = vmatmul.f32.gmra.mxu0 %v852
        %v871 = vpop.f32.mrf.mxu0
        %v872 = vadd.f32 0.0, %v871
        %873 = vdwg.mxu0
        %v874 = vld [vmem:[%s797] sm:$0xff]
        %v875 = vld [vmem:[%s797 + $0x8] sm:$0xff]
        %v876 = vld [vmem:[%s797 + $0x10] sm:$0xff]
        %v877 = vld [vmem:[%s797 + $0x18] sm:$0xff]
        %878 = vmatpush.msra.mxu0 0.0
        %879 = vmatpush.msra.mxu0 0.0
        %880 = vmatpush.msra.mxu0 0.0
        %881 = vmatpush.msra.mxu0 0.0
        %882 = vmatpush.msra.mxu0 0.0
        %883 = vmatpush.msra.mxu0 0.0
        %884 = vmatpush.msra.mxu0 0.0
        %885 = vmatpush.msra.mxu0 0.0
        %886 = vmatpush.msra.mxu0 0.0
        %887 = vmatpush.msra.mxu0 0.0
        %888 = vmatpush.msra.mxu0 0.0
        %889 = vmatpush.msra.mxu0 0.0
        %890 = vmatpush.msra.mxu0 %v877
        %891 = vmatpush.msra.mxu0 %v876
        %892 = vmatpush.msra.mxu0 %v875
        %893 = vmatpush.msra.mxu0 %v874
        %894 = vmatmul.f32.gmra.mxu0 %v852
        %v895 = vpop.f32.mrf.mxu0
        %v896 = vadd.f32 0.0, %v895
        %897 = vdwg.mxu0
        %v899 = vsel %vm823, %v845, 0
        %v902 = vsel %vm823, %v872, 0
        %904 = vmatpush.xpose.msra.mxu0 0.0
        %905 = vmatpush.xpose.msra.mxu0 0.0
        %906 = vmatpush.xpose.msra.mxu0 0.0
        %907 = vmatpush.xpose.msra.mxu0 0.0
        %908 = vmatpush.xpose.msra.mxu0 0.0
        %909 = vmatpush.xpose.msra.mxu0 0.0
        %910 = vmatpush.xpose.msra.mxu0 0.0
        %911 = vmatpush.xpose.msra.mxu0 0.0
        %912 = vmatpush.xpose.msra.mxu0 0.0
        %913 = vmatpush.xpose.msra.mxu0 0.0
        %914 = vmatpush.xpose.msra.mxu0 0.0
        %915 = vmatpush.xpose.msra.mxu0 0.0
        %916 = vmatpush.xpose.msra.mxu0 0.0
        %917 = vmatpush.xpose.msra.mxu0 0.0
        %918 = vmatpush.xpose.msra.mxu0 0.0
        %919 = vmatpush.xpose.msra.mxu0 %v902
        %920 = vmatmul.f32.gmra.mxu0 %v899
        %v921 = vpop.f32.mrf.mxu0
        %v922 = vadd.f32 0.0, %v921
        %923 = vdwg.mxu0
        %v924 = vmul.f32 %v922, 0.17677669
        %vm925 = vcmask 64512
        %v926 = vsel %vm925, %v924, -inf
        %927 = vmax.xlane.f32.xlu0 %v926
        %v928 = vpop.xlane.xlu0 %927
        %v929 = vsub.f32 %v924, %v928
        %v930 = vmul.f32 %v929, 1.442695
        %v931 = vpow.pop %v930
        %v932 = vsel %vm925, %v931, 0.0
        %933 = vadd.xlane.f32.xlu0 %v932
        %v934 = vpop.xlane.xlu0 %933
        %v935 = vrcp.pop %v934
        %v936 = vmul.f32 %v931, %v935
        %v938 = vsel %vm925, %v936, 0
        %940 = vmatpush.msra.mxu0 0.0
        %941 = vmatpush.msra.mxu0 0.0
        %942 = vmatpush.msra.mxu0 0.0
        %943 = vmatpush.msra.mxu0 0.0
        %944 = vmatpush.msra.mxu0 0.0
        %945 = vmatpush.msra.mxu0 0.0
        %946 = vmatpush.msra.mxu0 0.0
        %947 = vmatpush.msra.mxu0 0.0
        %948 = vmatpush.msra.mxu0 0.0
        %949 = vmatpush.msra.mxu0 0.0
        %950 = vmatpush.msra.mxu0 0.0
        %951 = vmatpush.msra.mxu0 0.0
        %952 = vmatpush.msra.mxu0 0.0
        %953 = vmatpush.msra.mxu0 0.0
        %954 = vmatpush.msra.mxu0 0.0
        %955 = vmatpush.msra.mxu0 %v896
        %956 = vmatmul.f32.gmra.mxu0 %v938
        %v957 = vpop.f32.mrf.mxu0
        %v958 = vadd.f32 0.0, %v957
        %959 = vdwg.mxu0
        %v960 = vld [vmem:[%s674] sm:$0xff]
        %v961 = vld [vmem:[%s674 + $0x8] sm:$0xff]
        %v962 = vld [vmem:[%s674 + $0x10] sm:$0xff]
        %v963 = vld [vmem:[%s674 + $0x18] sm:$0xff]
        %v965 = vsel %vm823, %v958, 0
        %967 = vmatpush.msra.mxu0 0.0
        %968 = vmatpush.msra.mxu0 0.0
        %969 = vmatpush.msra.mxu0 0.0
        %970 = vmatpush.msra.mxu0 0.0
        %971 = vmatpush.msra.mxu0 0.0
        %972 = vmatpush.msra.mxu0 0.0
        %973 = vmatpush.msra.mxu0 0.0
        %974 = vmatpush.msra.mxu0 0.0
        %975 = vmatpush.msra.mxu0 0.0
        %976 = vmatpush.msra.mxu0 0.0
        %977 = vmatpush.msra.mxu0 0.0
        %978 = vmatpush.msra.mxu0 0.0
        %979 = vmatpush.msra.mxu0 %v963
        %980 = vmatpush.msra.mxu0 %v962
        %981 = vmatpush.msra.mxu0 %v961
        %982 = vmatpush.msra.mxu0 %v960
        %983 = vmatmul.f32.gmra.mxu0 %v965
        %v984 = vpop.f32.mrf.mxu0
        %v985 = vadd.f32 0.0, %v984
        %986 = vdwg.mxu0
        %v987 = vadd.f32 %v816, %v985
        %v988 = vadd.f32 %v987, %v818
        %v989 = vld [vmem:[%s684] sm:$0xff]
        %v990 = vld [vmem:[%s684 + $0x8] sm:$0xff]
        %v991 = vld [vmem:[%s684 + $0x10] sm:$0xff]
        %v992 = vld [vmem:[%s684 + $0x18] sm:$0xff]
        %v993 = vld [vmem:[%s800] sm:$0x1]
        %v995 = vperm.slane %v993, 0
        %v998 = vsel %vm823, %v988, 0
        %1000 = vmatpush.msra.mxu0 0.0
        %1001 = vmatpush.msra.mxu0 0.0
        %1002 = vmatpush.msra.mxu0 0.0
        %1003 = vmatpush.msra.mxu0 0.0
        %1004 = vmatpush.msra.mxu0 0.0
        %1005 = vmatpush.msra.mxu0 0.0
        %1006 = vmatpush.msra.mxu0 0.0
        %1007 = vmatpush.msra.mxu0 0.0
        %1008 = vmatpush.msra.mxu0 0.0
        %1009 = vmatpush.msra.mxu0 0.0
        %1010 = vmatpush.msra.mxu0 0.0
        %1011 = vmatpush.msra.mxu0 0.0
        %1012 = vmatpush.msra.mxu0 %v992
        %1013 = vmatpush.msra.mxu0 %v991
        %1014 = vmatpush.msra.mxu0 %v990
        %1015 = vmatpush.msra.mxu0 %v989
        %1016 = vmatmul.f32.gmra.mxu0 %v998
        %v1017 = vpop.f32.mrf.mxu0
        %v1018 = vadd.f32 %v995, %v1017
        %1019 = vdwg.mxu0
        %v1020 = vmax.f32 %v1018, 0.0
        %v1021 = vld [vmem:[%s805] sm:$0xff]
        %v1022 = vld [vmem:[%s805 + $0x8] sm:$0xff]
        %v1023 = vld [vmem:[%s805 + $0x10] sm:$0xff]
        %v1024 = vld [vmem:[%s805 + $0x18] sm:$0xff]
        %v1025 = vld [vmem:[%s805 + $0x20] sm:$0xff]
        %v1026 = vld [vmem:[%s805 + $0x28] sm:$0xff]
        %v1027 = vld [vmem:[%s805 + $0x30] sm:$0xff]
        %v1028 = vld [vmem:[%s805 + $0x38] sm:$0xff]
        %vm1029 = vcmask 523264
        %v1031 = vsel %vm1029, %v1020, 0
        %1033 = vmatpush.msra.mxu0 0.0
        %1034 = vmatpush.msra.mxu0 0.0
        %1035 = vmatpush.msra.mxu0 0.0
        %1036 = vmatpush.msra.mxu0 0.0
        %1037 = vmatpush.msra.mxu0 0.0
        %1038 = vmatpush.msra.mxu0 0.0
        %1039 = vmatpush.msra.mxu0 0.0
        %1040 = vmatpush.msra.mxu0 0.0
        %1041 = vmatpush.msra.mxu0 %v1028
        %1042 = vmatpush.msra.mxu0 %v1027
        %1043 = vmatpush.msra.mxu0 %v1026
        %1044 = vmatpush.msra.mxu0 %v1025
        %1045 = vmatpush.msra.mxu0 %v1024
        %1046 = vmatpush.msra.mxu0 %v1023
        %1047 = vmatpush.msra.mxu0 %v1022
        %1048 = vmatpush.msra.mxu0 %v1021
        %1049 = vmatmul.f32.gmra.mxu0 %v1031
        %v1050 = vpop.f32.mrf.mxu0
        %v1051 = vadd.f32 0.0, %v1050
        %1052 = vdwg.mxu0
        %v1053 = vadd.f32 %v988, %v1051
        %v1054 = vld [vmem:[%s808] sm:$0x1]
        %v1056 = vperm.slane %v1054, 0
        %v1058 = vadd.f32 %v1053, %v1056
        %1059 = vst.msk [vmem:[#allocation2] sm:$0xff] %vm823, %v1058
        %p1060 = scmp.eq.s32.totalorder %s44, 1
        // Predicated region
        $region109: #{tpu_custom_call.1} parent=79 // pred_check
          %p1061 = pneg %p1060
        $region110: #{tpu_custom_call.1} parent=79 // pred_check_branch
          %1063 = sbr.rel (%p1061) target = $region112
        $region111: #{tpu_custom_call.1} parent=79 // pred_region
          %v1064 = vld [vmem:[#allocation2] sm:$0xff]
          %v1065 = vsel %vm823, %v1064, 0.0
          %1066 = vadd.xlane.f32.xlu0 %v1065
          %v1067 = vpop.xlane.xlu0 %1066
          %v1068 = vrcp.pop 32.0
          %v1069 = vmul.f32 32.0, %v1068
          %v1070 = vsub.f32 1.0, %v1069
          %v1071 = vmul.f32 %v1068, %v1070
          %v1072 = vadd.f32 %v1068, %v1071
          %vm1073 = vweird.f32 %v1068
          %v1074 = vsel %vm1073, %v1068, %v1072
          %v1075 = vmul.f32 %v1067, %v1074
          %v1076 = vsub.f32 %v1064, %v1075
          %v1077 = vmul.f32 %v1076, %v1076
          %v1078 = vsel %vm823, %v1077, 0.0
          %1079 = vadd.xlane.f32.xlu0 %v1078
          %v1080 = vpop.xlane.xlu0 %1079
          %v1081 = vmul.f32 %v1080, %v1074
          %v1082 = vadd.f32 %v1081, 1e-05
          %v1083 = vrsqrt.pop %v1082
          %v1084 = vmul.f32 %v1083, %v1082
          %v1085 = vmul.f32 %v1084, %v1083
          %v1086 = vmul.f32 0.5, %v1085
          %v1087 = vsub.f32 1.5, %v1086
          %v1088 = vmul.f32 %v1083, %v1087
          %vm1089 = vweird.f32 %v1082
          %vm1090 = vweird.f32 %v1083
          %vm1091 = vmor %vm1089, %vm1090
          %v1092 = vsel %vm1091, %v1083, %v1088
          %v1093 = vmul.f32 %v1076, %v1092
          %v1094 = vld [vmem:[%s11] sm:$0x1]
          %v1096 = vperm.slane %v1094, 0
          %v1098 = vmul.f32 %v1093, %v1096
          %v1099 = vld [vmem:[%s12] sm:$0x1]
          %v1101 = vperm.slane %v1099, 0
          %v1103 = vadd.f32 %v1098, %v1101
          %v1104 = vld [vmem:[#allocation12] sm:$0xff]
          %v1105 = vld [vmem:[#allocation12 + $0x8] sm:$0xff]
          %v1106 = vld [vmem:[#allocation12 + $0x10] sm:$0xff]
          %v1107 = vld [vmem:[#allocation12 + $0x18] sm:$0xff]
          %v1108 = vld [vmem:[%s14] sm:$0x1]
          %v1110 = vperm.slane %v1108, 0
          %v1113 = vsel %vm823, %v1103, 0
          %1115 = vmatpush.msra.mxu0 0.0
          %1116 = vmatpush.msra.mxu0 0.0
          %1117 = vmatpush.msra.mxu0 0.0
          %1118 = vmatpush.msra.mxu0 0.0
          %1119 = vmatpush.msra.mxu0 0.0
          %1120 = vmatpush.msra.mxu0 0.0
          %1121 = vmatpush.msra.mxu0 0.0
          %1122 = vmatpush.msra.mxu0 0.0
          %1123 = vmatpush.msra.mxu0 0.0
          %1124 = vmatpush.msra.mxu0 0.0
          %1125 = vmatpush.msra.mxu0 0.0
          %1126 = vmatpush.msra.mxu0 0.0
          %1127 = vmatpush.msra.mxu0 %v1107
          %1128 = vmatpush.msra.mxu0 %v1106
          %1129 = vmatpush.msra.mxu0 %v1105
          %1130 = vmatpush.msra.mxu0 %v1104
          %1131 = vmatmul.f32.gmra.mxu0 %v1113
          %v1132 = vpop.f32.mrf.mxu0
          %v1133 = vadd.f32 %v1110, %v1132
          %1134 = vdwg.mxu0
          %1135 = vst [vmem:[%s782] sm:$0xff] %v1133
        $region112: #{tpu_custom_call.1} parent=79 // pred_fallthru
          _
        %s1136 = sand.u32 %s431, 1
        %s1137 = scalar_lea.sflag [#allocation5], %s1136
        %s1138 = sand.u32 %s431, 1
        %s1139 = smul.addr %s1138, 8
        %s1140 = scalar_lea.vmem [#allocation14], %s1139
        // Predicated region
        $region113: #{tpu_custom_call.1} parent=79 // pred_check
          %p1141 = pneg %p441
        $region114: #{tpu_custom_call.1} parent=79 // pred_check_branch
          %1143 = sbr.rel (%p1141) target = $region116
        $region115: #{tpu_custom_call.1} parent=79 // pred_region
          %1145 = vsyncadd %s1137, 0
          %s1146 = smul.addr %s43, 8
          %s1147 = scalar_lea.hbm %s15, %s1146
          %s1149 = sshll.u32 %s1140, 4
          %s1150 = int_to_ptr.vmem [resolvable:$true] %s1149
          %s1151 = sshll.u32 %s1147, 4
          %s1152 = int_to_ptr.hbm [resolvable:$true] %s1151
          %1154 = dma.vmem_to_hbm [thread:$0]  %s1150, 128, %s1152, %s1137
        $region116: #{tpu_custom_call.1} parent=79 // pred_fallthru
          _
      $region80: #{tpu_custom_call.1} parent=5 // pred_fallthru
        _
      %p1155 = scmp.le.s32.totalorder 2, %s34
      // Predicated region
      $region117: #{tpu_custom_call.1} parent=5 // pred_check
        %p1156 = pneg %p1155
      $region118: #{tpu_custom_call.1} parent=5 // pred_check_branch
        %1158 = sbr.rel (%p1156) target = $region120
      $region119: #{tpu_custom_call.1} parent=5 // pred_region
        %s1159 = ssub.s32 %s34, 2
        // Predicated region
        $region121: #{tpu_custom_call.1} parent=119 // pred_check
          %p1160 = pneg %p447
        $region122: #{tpu_custom_call.1} parent=119 // pred_check_branch
          %1162 = sbr.rel (%p1160) target = $region124
        $region123: #{tpu_custom_call.1} parent=119 // pred_region
          %s1163 = sand.u32 %s432, 1
          %s1164 = scalar_lea.sflag [#allocation5], %s1163
          %s1165 = sand.u32 %s432, 1
          %s1166 = smul.addr %s1165, 8
          %s1167 = scalar_lea.vmem [#allocation14], %s1166
          %1169 = dma.done %s1164, 128
        $region124: #{tpu_custom_call.1} parent=119 // pred_fallthru
          _
      $region120: #{tpu_custom_call.1} parent=5 // pred_fallthru
        _
    $region6: #{tpu_custom_call.1} parent=1 // loop_footer
      %s38 = sadd.s32 1, %s34
    $region7: #{tpu_custom_call.1} parent=1 // loop_footer_branch
      %33 = sbr.rel target = $region3
    $region8: #{tpu_custom_call.1} parent=1 // loop_exit
      _
    %1170 = vsyncpa [#allocation4], 1
    %s1171 = scalar_lea.sflag [#allocation4], 1
    %1172 = vsyncpa %s1171, 1
    %1173 = vsyncpa [#allocation7], 1
    %s1174 = scalar_lea.sflag [#allocation7], 1
    %1175 = vsyncpa %s1174, 1
    %1176 = vsyncpa [#allocation10], 1
    %s1177 = scalar_lea.sflag [#allocation10], 1
    %1178 = vsyncpa %s1177, 1
    %1179 = vsyncpa [#allocation13], 1
    %1180 = vsyncpa [#allocation5], 1
    %s1181 = scalar_lea.sflag [#allocation5], 1
    %1182 = vsyncpa %s1181, 1

</llo_original>
